<compile_context>
chip_gen: v7x
topology: tpu7x:2x2x1
jax: 0.10.0
libtpu: 0.0.40
codegen_flags: <defaults>
</compile_context>

<pallas_src>
import math
from functools import partial

import jax
import jax.numpy as jnp
from jax.experimental import pallas as pl
from jax.experimental.pallas import tpu as pltpu


# ----------------------------- kernel helpers --------------------------------

def _layernorm(x, w, b, eps=1e-5):
    mu = jnp.mean(x, axis=-1, keepdims=True)
    xc = x - mu
    var = jnp.mean(xc * xc, axis=-1, keepdims=True)
    return xc * jax.lax.rsqrt(var + eps) * w + b


def _softmax_lastdim(s):
    # exp on EUP; divide moved to EUP via approx reciprocal (VPU stays free).
    m = jnp.max(s, axis=-1, keepdims=True)
    e = jnp.exp(s - m)
    return e * pl.reciprocal(jnp.sum(e, axis=-1, keepdims=True), approx=True)


# ------------------------------- Pallas kernel --------------------------------

def _encoder_kernel(B, N, D, nhead,
                    x_ref, mrow_ref, kbias_ref, wblob_ref, vblob_ref,
                    out_ref, ctx_ref):
    F = 2 * D
    Dh = D // nhead
    f32, bf16 = jnp.float32, jnp.bfloat16

    x = x_ref[...]                      # (B*N, D) f32, batch folded into rows
    mrow = mrow_ref[...]                # (B*N, D) f32, pre-broadcast row mask
    kbias = kbias_ref[...]              # (B*N, N) f32, pre-broadcast key bias

    # ---- static slices of the packed parameter blobs (free) ------------------
    wqkv = wblob_ref[0 * D:1 * D, :]            # (D, 3D)  bf16
    wo   = wblob_ref[1 * D:2 * D, 0:D]          # (D, D)
    w1   = wblob_ref[2 * D:3 * D, 0:F]          # (D, 2D)
    w2   = wblob_ref[3 * D:5 * D, 0:D]          # (2D, D)
    gw1  = wblob_ref[5 * D:6 * D, 0:F]
    gw2  = wblob_ref[6 * D:8 * D, 0:D]
    cw1  = wblob_ref[8 * D:9 * D, 0:F]
    cw2  = wblob_ref[9 * D:11 * D, 0:D]

    V = vblob_ref[...]                          # (12, 3D) f32 bias / LN blob
    bqkv = V[0:1, 0:3 * D]
    bo   = V[1:2, 0:D]
    b1   = V[2:3, 0:F]
    b2   = V[3:4, 0:D]
    ln1w = V[4:5, 0:D]
    ln1b = V[5:6, 0:D]
    ln2w = V[6:7, 0:D]
    ln2b = V[7:8, 0:D]
    gb1  = V[8:9, 0:F]
    gb2  = V[9:10, 0:D]
    cb1  = V[10:11, 0:F]
    cb2  = V[11:12, 0:D]

    def mm(a_bf, w_bf):                 # bf16 operands, f32 MXU accumulation
        return jnp.dot(a_bf, w_bf, preferred_element_type=f32)

    def ddt(a_bf, b_bf):                # contract last dims: (n,d)x(m,d)->(n,m)
        return jax.lax.dot_general(a_bf, b_bf, (((1,), (1,)), ((), ())),
                                    preferred_element_type=f32)

    # ---- nn.TransformerEncoderLayer (post-norm, ReLU FFN, eval dropout) ------
    qkv = mm(x.astype(bf16), wqkv) + bqkv       # (B*N, 3D) f32, one K=D push
    scale = 1.0 / math.sqrt(Dh)

    for b in range(B):                          # static B / nhead loops
        r0 = b * N
        qkv_b = qkv[r0:r0 + N, :].astype(bf16)  # aligned f32 row slice, 1 cast
        kb = kbias[r0:r0 + N, :]                # (N, N) f32
        for h in range(nhead):
            qh = qkv_b[:, h * Dh:(h + 1) * Dh]              # lane-only slices
            kh = qkv_b[:, D + h * Dh:D + (h + 1) * Dh]
            vh = qkv_b[:, 2 * D + h * Dh:2 * D + (h + 1) * Dh]
            s = ddt(qh, kh) * scale + kb                    # (N, N) f32
            p = _softmax_lastdim(s)
            # pack the per-head context into the ctx scratch; the out-proj
            # becomes a single K=D matmul below.
            ctx_ref[r0:r0 + N, h * Dh:(h + 1) * Dh] = mm(p.astype(bf16), vh)

    attn = mm(ctx_ref[...].astype(bf16), wo) + bo           # one K=D push

    h1 = _layernorm(x + attn, ln1w, ln1b)
    ff = jnp.maximum(mm(h1.astype(bf16), w1) + b1, 0.0)
    ff = mm(ff.astype(bf16), w2) + b2
    enc = _layernorm(h1 + ff, ln2w, ln2b) * mrow            # encoder_output*mask

    # ---- DynamicGraphLearner MLP node/edge features (dense on the full slab) -
    g = jnp.maximum(mm(enc.astype(bf16), gw1) + gb1, 0.0)
    ef = mm(g.astype(bf16), gw2) + gb2                      # (B*N, D) f32
    gscale = 1.0 / math.sqrt(D)

    # ---- masked-softmax adjacency + 2-layer GCN: per-batch 2-D end-to-end -----
    for b in range(B):
        r0 = b * N
        efb = ef[r0:r0 + N, :].astype(bf16)                 # (N, D) bf16
        sc = ddt(efb, efb) * gscale + kbias[r0:r0 + N, :]
        ew = _softmax_lastdim(sc).astype(bf16)              # (N, N) edge weights
        t1 = mm(efb, cw1) + cb1                             # GCN linear 1
        a1 = jnp.maximum(mm(ew, t1.astype(bf16)), 0.0)      # adj @ . , ReLU
        t2 = mm(a1.astype(bf16), cw2) + cb2                 # GCN linear 2
        a2 = mm(ew, t2.astype(bf16))                        # adj @ .
        out_ref[r0:r0 + N, :] = (enc[r0:r0 + N, :]
                                 + a2 * mrow[r0:r0 + N, :]).astype(out_ref.dtype)


# ------------------------------ parameter packing ------------------------------

def pack_params(params, D):
    """Pack 20 small params into one bf16 weight blob + one f32 bias/LN blob.

    Called ONCE, outside the forward path (hoisted per review)."""
    (wqkv, bqkv, wo, bo, w1, b1, w2, b2, ln1w, ln1b, ln2w, ln2b,
     gw1, gb1, gw2, gb2, cw1, cb1, cw2, cb2) = params
    C = 3 * D

    def padc(a):  # right-pad columns to the common width (3*D)
        return jnp.pad(a, ((0, 0), (0, C - a.shape[1])))

    wblob = jnp.concatenate(
        [padc(w) for w in (wqkv, wo, w1, w2, gw1, gw2, cw1, cw2)],
        axis=0).astype(jnp.bfloat16)                              # (11*D, 3*D)
    vblob = jnp.concatenate(
        [padc(v) for v in (bqkv, bo, b1, b2, ln1w, ln1b, ln2w, ln2b,
                           gb1, gb2, cb1, cb2)], axis=0)          # (12, 3*D) f32
    return wblob, vblob


# -------------------------------- wrapper --------------------------------------

def custom_transformer_encoder(x, mask, wblob, vblob, nhead):
    """x: (B, N, D) float32, mask: (B, N) bool (True = valid token).

    wblob / vblob are the pre-packed parameter blobs from pack_params()."""
    B, N, D = x.shape
    assert D % nhead == 0, "hidden_dim must be divisible by nhead"

    x2 = x.reshape(B * N, D)                              # free view
    mf = mask.astype(jnp.float32)
    # Pre-broadcast masks so the kernel never broadcasts:
    mrow = jnp.broadcast_to(mf.reshape(B * N, 1), (B * N, D))          # (B*N, D)
    kbias = jnp.broadcast_to(((mf - 1.0) * 1e30)[:, None, :],
                             (B, N, N)).reshape(B * N, N)              # (B*N, N)

    vmem = pl.BlockSpec(memory_space=pltpu.MemorySpace.VMEM)
    out = pl.pallas_call(
        partial(_encoder_kernel, B, N, D, nhead),
        out_shape=jax.ShapeDtypeStruct((B * N, D), jnp.float32),
        # No grid: single invocation, whole-array VMEM blocks, no pipeline
        # machinery / double buffering for a kernel that runs exactly once.
        in_specs=[vmem, vmem, vmem, vmem, vmem],
        out_specs=vmem,
        scratch_shapes=[pltpu.VMEM((B * N, D), jnp.float32)],   # attn context
    )(x2, mrow, kbias, wblob, vblob)
    return out.reshape(B, N, D)


# ------------------------- deterministic parameter init ------------------------

def init_params(key, D):
    ks = iter(jax.random.split(key, 24))

    def lin(fi, fo):
        w = jax.random.normal(next(ks), (fi, fo), jnp.float32) / math.sqrt(fi)
        b = 0.01 * jax.random.normal(next(ks), (1, fo), jnp.float32)
        return w, b

    wqkv, bqkv = lin(D, 3 * D)        # attention in-proj
    wo, bo = lin(D, D)                # attention out-proj
    w1, b1 = lin(D, 2 * D)            # FFN linear1
    w2, b2 = lin(2 * D, D)            # FFN linear2
    ln1w = jnp.ones((1, D), jnp.float32); ln1b = jnp.zeros((1, D), jnp.float32)
    ln2w = jnp.ones((1, D), jnp.float32); ln2b = jnp.zeros((1, D), jnp.float32)
    gw1, gb1 = lin(D, 2 * D)          # DynamicGraphLearner MLP layer 1
    gw2, gb2 = lin(2 * D, D)          # DynamicGraphLearner MLP layer 2
    cw1, cb1 = lin(D, 2 * D)          # GCN layer 1
    cw2, cb2 = lin(2 * D, D)          # GCN layer 2
    return [wqkv, bqkv, wo, bo, w1, b1, w2, b2,
            ln1w, ln1b, ln2w, ln2b,
            gw1, gb1, gw2, gb2,
            cw1, cb1, cw2, cb2]


# ------------------------------ pure-JAX reference ------------------------------
# Mirrors the kernel's mixed precision (bf16 matmul operands, f32 accumulation)
# so the check is tight; softmax uses exact division (kernel uses approx recip).

def reference(x, mask, params, nhead):
    (wqkv, bqkv, wo, bo, w1, b1, w2, b2, ln1w, ln1b, ln2w, ln2b,
     gw1, gb1, gw2, gb2, cw1, cb1, cw2, cb2) = params
    B, N, D = x.shape
    H, Dh = nhead, D // nhead
    f32, bf16 = jnp.float32, jnp.bfloat16
    mf = mask.astype(f32)
    mq = mf[..., None]                               # (B,N,1)
    kbias = ((mf - 1.0) * 1e30)[:, None, :]          # (B,1,N)

    def mm(eq, a, b):
        return jnp.einsum(eq, a.astype(bf16), b.astype(bf16),
                          preferred_element_type=f32)

    def softmax(s):
        m = jnp.max(s, axis=-1, keepdims=True)
        e = jnp.exp(s - m)
        return e / jnp.sum(e, axis=-1, keepdims=True)

    def ln(y, w, b, eps=1e-5):
        mu = jnp.mean(y, -1, keepdims=True)
        yc = y - mu
        var = jnp.mean(yc * yc, -1, keepdims=True)
        return yc * jax.lax.rsqrt(var + eps) * w + b

    qkv = mm("bnd,df->bnf", x, wqkv) + bqkv

    def split(a):
        return a.reshape(B, N, H, Dh).transpose(0, 2, 1, 3)

    q, k, v = split(qkv[..., :D]), split(qkv[..., D:2 * D]), split(qkv[..., 2 * D:])
    s = mm("bhqd,bhkd->bhqk", q, k) * (1.0 / math.sqrt(Dh)) + kbias[:, None, :, :]
    p = softmax(s)
    attn = mm("bhqk,bhkd->bhqd", p, v).transpose(0, 2, 1, 3).reshape(B, N, D)
    attn = mm("bnd,do->bno", attn, wo) + bo

    h1 = ln(x + attn, ln1w, ln1b)
    ff = jnp.maximum(mm("bnd,df->bnf", h1, w1) + b1, 0.0)
    ff = mm("bnf,fd->bnd", ff, w2) + b2
    enc = ln(h1 + ff, ln2w, ln2b) * mq

    ef = jnp.maximum(mm("bnd,df->bnf", enc, gw1) + gb1, 0.0)
    ef = mm("bnf,fd->bnd", ef, gw2) + gb2
    sc = mm("bqd,bkd->bqk", ef, ef) * (1.0 / math.sqrt(D)) + kbias
    ew = softmax(sc)

    t1 = mm("bnd,df->bnf", ef, cw1) + cb1
    a1 = jnp.maximum(mm("bqk,bkf->bqf", ew, t1), 0.0)
    t2 = mm("bnf,fd->bnd", a1, cw2) + cb2
    a2 = mm("bqk,bkd->bqd", ew, t2)
    return enc + a2 * mq


# ----------------------------------- main ---------------------------------------

if __name__ == "__main__":
    B, N, D, NHEAD = 2, 8, 32, 4      # hidden_dim=32, seq_len=8, nhead=4, patch=1

    key = jax.random.PRNGKey(0)
    kx, kp = jax.random.split(key)
    x = jax.random.normal(kx, (B, N, D), jnp.float32)
    # mask: True = valid token; batch 1 has 3 padded trailing positions
    mask = jnp.array([[True] * N,
                      [True] * (N - 3) + [False] * 3])
    params = init_params(kp, D)

    # Hoisted out of the hot path: pack the 20 small params ONCE.
    wblob, vblob = pack_params(params, D)

    fwd = jax.jit(partial(custom_transformer_encoder, nhead=NHEAD))
    out = jax.block_until_ready(fwd(x, mask, wblob, vblob))

    ref = reference(x, mask, params, NHEAD)
    assert out.shape == (B, N, D)
    # Tolerance covers the EUP approx-reciprocal in the two softmaxes plus f32
    # accumulation-order differences (bf16 operand rounding is shared).
    assert jnp.allclose(out, ref, atol=2e-2, rtol=2e-2), "kernel/reference mismatch"

    print("KERNEL_OK")
</pallas_src>

<mosaic_0001>
module attributes {stable_mosaic.version = 11 : i64} {
  func.func @_encoder_kernel(%arg0: memref<16x32xf32, #tpu.memory_space<vmem>>, %arg1: memref<16x32xf32, #tpu.memory_space<vmem>>, %arg2: memref<16x8xf32, #tpu.memory_space<vmem>>, %arg3: memref<352x96xbf16, #tpu.memory_space<vmem>>, %arg4: memref<12x96xf32, #tpu.memory_space<vmem>>, %arg5: memref<16x32xf32, #tpu.memory_space<vmem>>, %arg6: memref<16x32xf32, #tpu.memory_space<vmem>>) attributes {dimension_semantics = [], scalar_prefetch = 0 : i64, scratch_operands = 1 : i64, tpu.core_type = #tpu.core_type<tc>} {
    %c0 = arith.constant 0 : index
    %c0_0 = arith.constant 0 : index
    %0 = vector.load %arg0[%c0, %c0_0] : memref<16x32xf32, #tpu.memory_space<vmem>>, vector<16x32xf32>
    %c0_1 = arith.constant 0 : index
    %c0_2 = arith.constant 0 : index
    %1 = vector.load %arg1[%c0_1, %c0_2] : memref<16x32xf32, #tpu.memory_space<vmem>>, vector<16x32xf32>
    %c0_3 = arith.constant 0 : index
    %c0_4 = arith.constant 0 : index
    %2 = vector.load %arg2[%c0_3, %c0_4] : memref<16x8xf32, #tpu.memory_space<vmem>>, vector<16x8xf32>
    %c0_5 = arith.constant 0 : index
    %c0_6 = arith.constant 0 : index
    %3 = vector.load %arg3[%c0_5, %c0_6] : memref<352x96xbf16, #tpu.memory_space<vmem>>, vector<32x96xbf16>
    %c32 = arith.constant 32 : index
    %c0_7 = arith.constant 0 : index
    %4 = vector.load %arg3[%c32, %c0_7] : memref<352x96xbf16, #tpu.memory_space<vmem>>, vector<32x32xbf16>
    %c64 = arith.constant 64 : index
    %c0_8 = arith.constant 0 : index
    %5 = vector.load %arg3[%c64, %c0_8] : memref<352x96xbf16, #tpu.memory_space<vmem>>, vector<32x64xbf16>
    %c96 = arith.constant 96 : index
    %c0_9 = arith.constant 0 : index
    %6 = vector.load %arg3[%c96, %c0_9] : memref<352x96xbf16, #tpu.memory_space<vmem>>, vector<64x32xbf16>
    %c160 = arith.constant 160 : index
    %c0_10 = arith.constant 0 : index
    %7 = vector.load %arg3[%c160, %c0_10] : memref<352x96xbf16, #tpu.memory_space<vmem>>, vector<32x64xbf16>
    %c192 = arith.constant 192 : index
    %c0_11 = arith.constant 0 : index
    %8 = vector.load %arg3[%c192, %c0_11] : memref<352x96xbf16, #tpu.memory_space<vmem>>, vector<64x32xbf16>
    %c256 = arith.constant 256 : index
    %c0_12 = arith.constant 0 : index
    %9 = vector.load %arg3[%c256, %c0_12] : memref<352x96xbf16, #tpu.memory_space<vmem>>, vector<32x64xbf16>
    %c288 = arith.constant 288 : index
    %c0_13 = arith.constant 0 : index
    %10 = vector.load %arg3[%c288, %c0_13] : memref<352x96xbf16, #tpu.memory_space<vmem>>, vector<64x32xbf16>
    %c0_14 = arith.constant 0 : index
    %c0_15 = arith.constant 0 : index
    %11 = vector.load %arg4[%c0_14, %c0_15] : memref<12x96xf32, #tpu.memory_space<vmem>>, vector<12x96xf32>
    %12 = vector.extract_strided_slice %11 {offsets = [0, 0], sizes = [1, 96], strides = [1, 1]} : vector<12x96xf32> to vector<1x96xf32>
    %13 = vector.extract_strided_slice %11 {offsets = [1, 0], sizes = [1, 32], strides = [1, 1]} : vector<12x96xf32> to vector<1x32xf32>
    %14 = vector.extract_strided_slice %11 {offsets = [2, 0], sizes = [1, 64], strides = [1, 1]} : vector<12x96xf32> to vector<1x64xf32>
    %15 = vector.extract_strided_slice %11 {offsets = [3, 0], sizes = [1, 32], strides = [1, 1]} : vector<12x96xf32> to vector<1x32xf32>
    %16 = vector.extract_strided_slice %11 {offsets = [4, 0], sizes = [1, 32], strides = [1, 1]} : vector<12x96xf32> to vector<1x32xf32>
    %17 = vector.extract_strided_slice %11 {offsets = [5, 0], sizes = [1, 32], strides = [1, 1]} : vector<12x96xf32> to vector<1x32xf32>
    %18 = vector.extract_strided_slice %11 {offsets = [6, 0], sizes = [1, 32], strides = [1, 1]} : vector<12x96xf32> to vector<1x32xf32>
    %19 = vector.extract_strided_slice %11 {offsets = [7, 0], sizes = [1, 32], strides = [1, 1]} : vector<12x96xf32> to vector<1x32xf32>
    %20 = vector.extract_strided_slice %11 {offsets = [8, 0], sizes = [1, 64], strides = [1, 1]} : vector<12x96xf32> to vector<1x64xf32>
    %21 = vector.extract_strided_slice %11 {offsets = [9, 0], sizes = [1, 32], strides = [1, 1]} : vector<12x96xf32> to vector<1x32xf32>
    %22 = vector.extract_strided_slice %11 {offsets = [10, 0], sizes = [1, 64], strides = [1, 1]} : vector<12x96xf32> to vector<1x64xf32>
    %23 = vector.extract_strided_slice %11 {offsets = [11, 0], sizes = [1, 32], strides = [1, 1]} : vector<12x96xf32> to vector<1x32xf32>
    %24 = arith.truncf %0 : vector<16x32xf32> to vector<16x32xbf16>
    %cst = arith.constant dense<0.000000e+00> : vector<16x96xf32>
    %25 = tpu.matmul %24, %3, %cst {dimension_numbers = #tpu.dot_dimension_numbers<[1], [0], [0], [1], [0, 0, 1, 1], [], []>} : vector<16x32xbf16>, vector<32x96xbf16>, vector<16x96xf32> -> vector<16x96xf32>
    %26 = vector.broadcast %12 : vector<1x96xf32> to vector<16x96xf32>
    %27 = arith.addf %25, %26 : vector<16x96xf32>
    %28 = vector.extract_strided_slice %27 {offsets = [0, 0], sizes = [8, 96], strides = [1, 1]} : vector<16x96xf32> to vector<8x96xf32>
    %29 = arith.truncf %28 : vector<8x96xf32> to vector<8x96xbf16>
    %30 = vector.extract_strided_slice %2 {offsets = [0, 0], sizes = [8, 8], strides = [1, 1]} : vector<16x8xf32> to vector<8x8xf32>
    %31 = vector.extract_strided_slice %29 {offsets = [0, 0], sizes = [8, 8], strides = [1, 1]} : vector<8x96xbf16> to vector<8x8xbf16>
    %32 = vector.extract_strided_slice %29 {offsets = [0, 32], sizes = [8, 8], strides = [1, 1]} : vector<8x96xbf16> to vector<8x8xbf16>
    %33 = vector.extract_strided_slice %29 {offsets = [0, 64], sizes = [8, 8], strides = [1, 1]} : vector<8x96xbf16> to vector<8x8xbf16>
    %cst_16 = arith.constant dense<0.000000e+00> : vector<8x8xf32>
    %34 = tpu.matmul %31, %32, %cst_16 {dimension_numbers = #tpu.dot_dimension_numbers<[1], [1], [0], [0], [0, 0, 1, 0], [], []>} : vector<8x8xbf16>, vector<8x8xbf16>, vector<8x8xf32> -> vector<8x8xf32>
    %cst_17 = arith.constant 0.353553385 : f32
    %35 = vector.broadcast %cst_17 : f32 to vector<8x8xf32>
    %36 = arith.mulf %34, %35 : vector<8x8xf32>
    %37 = arith.addf %36, %30 : vector<8x8xf32>
    %cst_18 = arith.constant dense<0xFF800000> : vector<8xf32>
    %38 = vector.multi_reduction <maximumf>, %37, %cst_18 [1] : vector<8x8xf32> to vector<8xf32>
    %39 = vector.shape_cast %38 : vector<8xf32> to vector<8x1xf32>
    %40 = vector.broadcast %39 : vector<8x1xf32> to vector<8x8xf32>
    %41 = arith.subf %37, %40 : vector<8x8xf32>
    %42 = math.exp %41 : vector<8x8xf32>
    %cst_19 = arith.constant dense<0.000000e+00> : vector<8xf32>
    %43 = vector.multi_reduction <add>, %42, %cst_19 [1] : vector<8x8xf32> to vector<8xf32>
    %44 = vector.shape_cast %43 : vector<8xf32> to vector<8x1xf32>
    %45 = tpu.reciprocal %44 {approx = true} : vector<8x1xf32> -> vector<8x1xf32>
    %46 = vector.broadcast %45 : vector<8x1xf32> to vector<8x8xf32>
    %47 = arith.mulf %42, %46 : vector<8x8xf32>
    %48 = arith.truncf %47 : vector<8x8xf32> to vector<8x8xbf16>
    %cst_20 = arith.constant dense<0.000000e+00> : vector<8x8xf32>
    %49 = tpu.matmul %48, %33, %cst_20 {dimension_numbers = #tpu.dot_dimension_numbers<[1], [0], [0], [1], [0, 0, 1, 1], [], []>} : vector<8x8xbf16>, vector<8x8xbf16>, vector<8x8xf32> -> vector<8x8xf32>
    %c0_21 = arith.constant 0 : index
    %c0_22 = arith.constant 0 : index
    %50 = vector.load %arg6[%c0_21, %c0_22] : memref<16x32xf32, #tpu.memory_space<vmem>>, vector<8x8xf32>
    tpu.vector_store %arg6[%c0_21, %c0_22], %49 {strides = array<i32>} : memref<16x32xf32, #tpu.memory_space<vmem>>, vector<8x8xf32>,
    %51 = vector.extract_strided_slice %29 {offsets = [0, 8], sizes = [8, 8], strides = [1, 1]} : vector<8x96xbf16> to vector<8x8xbf16>
    %52 = vector.extract_strided_slice %29 {offsets = [0, 40], sizes = [8, 8], strides = [1, 1]} : vector<8x96xbf16> to vector<8x8xbf16>
    %53 = vector.extract_strided_slice %29 {offsets = [0, 72], sizes = [8, 8], strides = [1, 1]} : vector<8x96xbf16> to vector<8x8xbf16>
    %cst_23 = arith.constant dense<0.000000e+00> : vector<8x8xf32>
    %54 = tpu.matmul %51, %52, %cst_23 {dimension_numbers = #tpu.dot_dimension_numbers<[1], [1], [0], [0], [0, 0, 1, 0], [], []>} : vector<8x8xbf16>, vector<8x8xbf16>, vector<8x8xf32> -> vector<8x8xf32>
    %cst_24 = arith.constant 0.353553385 : f32
    %55 = vector.broadcast %cst_24 : f32 to vector<8x8xf32>
    %56 = arith.mulf %54, %55 : vector<8x8xf32>
    %57 = arith.addf %56, %30 : vector<8x8xf32>
    %cst_25 = arith.constant dense<0xFF800000> : vector<8xf32>
    %58 = vector.multi_reduction <maximumf>, %57, %cst_25 [1] : vector<8x8xf32> to vector<8xf32>
    %59 = vector.shape_cast %58 : vector<8xf32> to vector<8x1xf32>
    %60 = vector.broadcast %59 : vector<8x1xf32> to vector<8x8xf32>
    %61 = arith.subf %57, %60 : vector<8x8xf32>
    %62 = math.exp %61 : vector<8x8xf32>
    %cst_26 = arith.constant dense<0.000000e+00> : vector<8xf32>
    %63 = vector.multi_reduction <add>, %62, %cst_26 [1] : vector<8x8xf32> to vector<8xf32>
    %64 = vector.shape_cast %63 : vector<8xf32> to vector<8x1xf32>
    %65 = tpu.reciprocal %64 {approx = true} : vector<8x1xf32> -> vector<8x1xf32>
    %66 = vector.broadcast %65 : vector<8x1xf32> to vector<8x8xf32>
    %67 = arith.mulf %62, %66 : vector<8x8xf32>
    %68 = arith.truncf %67 : vector<8x8xf32> to vector<8x8xbf16>
    %cst_27 = arith.constant dense<0.000000e+00> : vector<8x8xf32>
    %69 = tpu.matmul %68, %53, %cst_27 {dimension_numbers = #tpu.dot_dimension_numbers<[1], [0], [0], [1], [0, 0, 1, 1], [], []>} : vector<8x8xbf16>, vector<8x8xbf16>, vector<8x8xf32> -> vector<8x8xf32>
    %c0_28 = arith.constant 0 : index
    %c8 = arith.constant 8 : index
    %70 = vector.load %arg6[%c0_28, %c8] : memref<16x32xf32, #tpu.memory_space<vmem>>, vector<8x8xf32>
    tpu.vector_store %arg6[%c0_28, %c8], %69 {strides = array<i32>} : memref<16x32xf32, #tpu.memory_space<vmem>>, vector<8x8xf32>,
    %71 = vector.extract_strided_slice %29 {offsets = [0, 16], sizes = [8, 8], strides = [1, 1]} : vector<8x96xbf16> to vector<8x8xbf16>
    %72 = vector.extract_strided_slice %29 {offsets = [0, 48], sizes = [8, 8], strides = [1, 1]} : vector<8x96xbf16> to vector<8x8xbf16>
    %73 = vector.extract_strided_slice %29 {offsets = [0, 80], sizes = [8, 8], strides = [1, 1]} : vector<8x96xbf16> to vector<8x8xbf16>
    %cst_29 = arith.constant dense<0.000000e+00> : vector<8x8xf32>
    %74 = tpu.matmul %71, %72, %cst_29 {dimension_numbers = #tpu.dot_dimension_numbers<[1], [1], [0], [0], [0, 0, 1, 0], [], []>} : vector<8x8xbf16>, vector<8x8xbf16>, vector<8x8xf32> -> vector<8x8xf32>
    %cst_30 = arith.constant 0.353553385 : f32
    %75 = vector.broadcast %cst_30 : f32 to vector<8x8xf32>
    %76 = arith.mulf %74, %75 : vector<8x8xf32>
    %77 = arith.addf %76, %30 : vector<8x8xf32>
    %cst_31 = arith.constant dense<0xFF800000> : vector<8xf32>
    %78 = vector.multi_reduction <maximumf>, %77, %cst_31 [1] : vector<8x8xf32> to vector<8xf32>
    %79 = vector.shape_cast %78 : vector<8xf32> to vector<8x1xf32>
    %80 = vector.broadcast %79 : vector<8x1xf32> to vector<8x8xf32>
    %81 = arith.subf %77, %80 : vector<8x8xf32>
    %82 = math.exp %81 : vector<8x8xf32>
    %cst_32 = arith.constant dense<0.000000e+00> : vector<8xf32>
    %83 = vector.multi_reduction <add>, %82, %cst_32 [1] : vector<8x8xf32> to vector<8xf32>
    %84 = vector.shape_cast %83 : vector<8xf32> to vector<8x1xf32>
    %85 = tpu.reciprocal %84 {approx = true} : vector<8x1xf32> -> vector<8x1xf32>
    %86 = vector.broadcast %85 : vector<8x1xf32> to vector<8x8xf32>
    %87 = arith.mulf %82, %86 : vector<8x8xf32>
    %88 = arith.truncf %87 : vector<8x8xf32> to vector<8x8xbf16>
    %cst_33 = arith.constant dense<0.000000e+00> : vector<8x8xf32>
    %89 = tpu.matmul %88, %73, %cst_33 {dimension_numbers = #tpu.dot_dimension_numbers<[1], [0], [0], [1], [0, 0, 1, 1], [], []>} : vector<8x8xbf16>, vector<8x8xbf16>, vector<8x8xf32> -> vector<8x8xf32>
    %c0_34 = arith.constant 0 : index
    %c16 = arith.constant 16 : index
    %90 = vector.load %arg6[%c0_34, %c16] : memref<16x32xf32, #tpu.memory_space<vmem>>, vector<8x8xf32>
    tpu.vector_store %arg6[%c0_34, %c16], %89 {strides = array<i32>} : memref<16x32xf32, #tpu.memory_space<vmem>>, vector<8x8xf32>,
    %91 = vector.extract_strided_slice %29 {offsets = [0, 24], sizes = [8, 8], strides = [1, 1]} : vector<8x96xbf16> to vector<8x8xbf16>
    %92 = vector.extract_strided_slice %29 {offsets = [0, 56], sizes = [8, 8], strides = [1, 1]} : vector<8x96xbf16> to vector<8x8xbf16>
    %93 = vector.extract_strided_slice %29 {offsets = [0, 88], sizes = [8, 8], strides = [1, 1]} : vector<8x96xbf16> to vector<8x8xbf16>
    %cst_35 = arith.constant dense<0.000000e+00> : vector<8x8xf32>
    %94 = tpu.matmul %91, %92, %cst_35 {dimension_numbers = #tpu.dot_dimension_numbers<[1], [1], [0], [0], [0, 0, 1, 0], [], []>} : vector<8x8xbf16>, vector<8x8xbf16>, vector<8x8xf32> -> vector<8x8xf32>
    %cst_36 = arith.constant 0.353553385 : f32
    %95 = vector.broadcast %cst_36 : f32 to vector<8x8xf32>
    %96 = arith.mulf %94, %95 : vector<8x8xf32>
    %97 = arith.addf %96, %30 : vector<8x8xf32>
    %cst_37 = arith.constant dense<0xFF800000> : vector<8xf32>
    %98 = vector.multi_reduction <maximumf>, %97, %cst_37 [1] : vector<8x8xf32> to vector<8xf32>
    %99 = vector.shape_cast %98 : vector<8xf32> to vector<8x1xf32>
    %100 = vector.broadcast %99 : vector<8x1xf32> to vector<8x8xf32>
    %101 = arith.subf %97, %100 : vector<8x8xf32>
    %102 = math.exp %101 : vector<8x8xf32>
    %cst_38 = arith.constant dense<0.000000e+00> : vector<8xf32>
    %103 = vector.multi_reduction <add>, %102, %cst_38 [1] : vector<8x8xf32> to vector<8xf32>
    %104 = vector.shape_cast %103 : vector<8xf32> to vector<8x1xf32>
    %105 = tpu.reciprocal %104 {approx = true} : vector<8x1xf32> -> vector<8x1xf32>
    %106 = vector.broadcast %105 : vector<8x1xf32> to vector<8x8xf32>
    %107 = arith.mulf %102, %106 : vector<8x8xf32>
    %108 = arith.truncf %107 : vector<8x8xf32> to vector<8x8xbf16>
    %cst_39 = arith.constant dense<0.000000e+00> : vector<8x8xf32>
    %109 = tpu.matmul %108, %93, %cst_39 {dimension_numbers = #tpu.dot_dimension_numbers<[1], [0], [0], [1], [0, 0, 1, 1], [], []>} : vector<8x8xbf16>, vector<8x8xbf16>, vector<8x8xf32> -> vector<8x8xf32>
    %c0_40 = arith.constant 0 : index
    %c24 = arith.constant 24 : index
    %110 = vector.load %arg6[%c0_40, %c24] : memref<16x32xf32, #tpu.memory_space<vmem>>, vector<8x8xf32>
    tpu.vector_store %arg6[%c0_40, %c24], %109 {strides = array<i32>} : memref<16x32xf32, #tpu.memory_space<vmem>>, vector<8x8xf32>,
    %111 = vector.extract_strided_slice %27 {offsets = [8, 0], sizes = [8, 96], strides = [1, 1]} : vector<16x96xf32> to vector<8x96xf32>
    %112 = arith.truncf %111 : vector<8x96xf32> to vector<8x96xbf16>
    %113 = vector.extract_strided_slice %2 {offsets = [8, 0], sizes = [8, 8], strides = [1, 1]} : vector<16x8xf32> to vector<8x8xf32>
    %114 = vector.extract_strided_slice %112 {offsets = [0, 0], sizes = [8, 8], strides = [1, 1]} : vector<8x96xbf16> to vector<8x8xbf16>
    %115 = vector.extract_strided_slice %112 {offsets = [0, 32], sizes = [8, 8], strides = [1, 1]} : vector<8x96xbf16> to vector<8x8xbf16>
    %116 = vector.extract_strided_slice %112 {offsets = [0, 64], sizes = [8, 8], strides = [1, 1]} : vector<8x96xbf16> to vector<8x8xbf16>
    %cst_41 = arith.constant dense<0.000000e+00> : vector<8x8xf32>
    %117 = tpu.matmul %114, %115, %cst_41 {dimension_numbers = #tpu.dot_dimension_numbers<[1], [1], [0], [0], [0, 0, 1, 0], [], []>} : vector<8x8xbf16>, vector<8x8xbf16>, vector<8x8xf32> -> vector<8x8xf32>
    %cst_42 = arith.constant 0.353553385 : f32
    %118 = vector.broadcast %cst_42 : f32 to vector<8x8xf32>
    %119 = arith.mulf %117, %118 : vector<8x8xf32>
    %120 = arith.addf %119, %113 : vector<8x8xf32>
    %cst_43 = arith.constant dense<0xFF800000> : vector<8xf32>
    %121 = vector.multi_reduction <maximumf>, %120, %cst_43 [1] : vector<8x8xf32> to vector<8xf32>
    %122 = vector.shape_cast %121 : vector<8xf32> to vector<8x1xf32>
    %123 = vector.broadcast %122 : vector<8x1xf32> to vector<8x8xf32>
    %124 = arith.subf %120, %123 : vector<8x8xf32>
    %125 = math.exp %124 : vector<8x8xf32>
    %cst_44 = arith.constant dense<0.000000e+00> : vector<8xf32>
    %126 = vector.multi_reduction <add>, %125, %cst_44 [1] : vector<8x8xf32> to vector<8xf32>
    %127 = vector.shape_cast %126 : vector<8xf32> to vector<8x1xf32>
    %128 = tpu.reciprocal %127 {approx = true} : vector<8x1xf32> -> vector<8x1xf32>
    %129 = vector.broadcast %128 : vector<8x1xf32> to vector<8x8xf32>
    %130 = arith.mulf %125, %129 : vector<8x8xf32>
    %131 = arith.truncf %130 : vector<8x8xf32> to vector<8x8xbf16>
    %cst_45 = arith.constant dense<0.000000e+00> : vector<8x8xf32>
    %132 = tpu.matmul %131, %116, %cst_45 {dimension_numbers = #tpu.dot_dimension_numbers<[1], [0], [0], [1], [0, 0, 1, 1], [], []>} : vector<8x8xbf16>, vector<8x8xbf16>, vector<8x8xf32> -> vector<8x8xf32>
    %c8_46 = arith.constant 8 : index
    %c0_47 = arith.constant 0 : index
    %133 = vector.load %arg6[%c8_46, %c0_47] : memref<16x32xf32, #tpu.memory_space<vmem>>, vector<8x8xf32>
    tpu.vector_store %arg6[%c8_46, %c0_47], %132 {strides = array<i32>} : memref<16x32xf32, #tpu.memory_space<vmem>>, vector<8x8xf32>,
    %134 = vector.extract_strided_slice %112 {offsets = [0, 8], sizes = [8, 8], strides = [1, 1]} : vector<8x96xbf16> to vector<8x8xbf16>
    %135 = vector.extract_strided_slice %112 {offsets = [0, 40], sizes = [8, 8], strides = [1, 1]} : vector<8x96xbf16> to vector<8x8xbf16>
    %136 = vector.extract_strided_slice %112 {offsets = [0, 72], sizes = [8, 8], strides = [1, 1]} : vector<8x96xbf16> to vector<8x8xbf16>
    %cst_48 = arith.constant dense<0.000000e+00> : vector<8x8xf32>
    %137 = tpu.matmul %134, %135, %cst_48 {dimension_numbers = #tpu.dot_dimension_numbers<[1], [1], [0], [0], [0, 0, 1, 0], [], []>} : vector<8x8xbf16>, vector<8x8xbf16>, vector<8x8xf32> -> vector<8x8xf32>
    %cst_49 = arith.constant 0.353553385 : f32
    %138 = vector.broadcast %cst_49 : f32 to vector<8x8xf32>
    %139 = arith.mulf %137, %138 : vector<8x8xf32>
    %140 = arith.addf %139, %113 : vector<8x8xf32>
    %cst_50 = arith.constant dense<0xFF800000> : vector<8xf32>
    %141 = vector.multi_reduction <maximumf>, %140, %cst_50 [1] : vector<8x8xf32> to vector<8xf32>
    %142 = vector.shape_cast %141 : vector<8xf32> to vector<8x1xf32>
    %143 = vector.broadcast %142 : vector<8x1xf32> to vector<8x8xf32>
    %144 = arith.subf %140, %143 : vector<8x8xf32>
    %145 = math.exp %144 : vector<8x8xf32>
    %cst_51 = arith.constant dense<0.000000e+00> : vector<8xf32>
    %146 = vector.multi_reduction <add>, %145, %cst_51 [1] : vector<8x8xf32> to vector<8xf32>
    %147 = vector.shape_cast %146 : vector<8xf32> to vector<8x1xf32>
    %148 = tpu.reciprocal %147 {approx = true} : vector<8x1xf32> -> vector<8x1xf32>
    %149 = vector.broadcast %148 : vector<8x1xf32> to vector<8x8xf32>
    %150 = arith.mulf %145, %149 : vector<8x8xf32>
    %151 = arith.truncf %150 : vector<8x8xf32> to vector<8x8xbf16>
    %cst_52 = arith.constant dense<0.000000e+00> : vector<8x8xf32>
    %152 = tpu.matmul %151, %136, %cst_52 {dimension_numbers = #tpu.dot_dimension_numbers<[1], [0], [0], [1], [0, 0, 1, 1], [], []>} : vector<8x8xbf16>, vector<8x8xbf16>, vector<8x8xf32> -> vector<8x8xf32>
    %c8_53 = arith.constant 8 : index
    %c8_54 = arith.constant 8 : index
    %153 = vector.load %arg6[%c8_53, %c8_54] : memref<16x32xf32, #tpu.memory_space<vmem>>, vector<8x8xf32>
    tpu.vector_store %arg6[%c8_53, %c8_54], %152 {strides = array<i32>} : memref<16x32xf32, #tpu.memory_space<vmem>>, vector<8x8xf32>,
    %154 = vector.extract_strided_slice %112 {offsets = [0, 16], sizes = [8, 8], strides = [1, 1]} : vector<8x96xbf16> to vector<8x8xbf16>
    %155 = vector.extract_strided_slice %112 {offsets = [0, 48], sizes = [8, 8], strides = [1, 1]} : vector<8x96xbf16> to vector<8x8xbf16>
    %156 = vector.extract_strided_slice %112 {offsets = [0, 80], sizes = [8, 8], strides = [1, 1]} : vector<8x96xbf16> to vector<8x8xbf16>
    %cst_55 = arith.constant dense<0.000000e+00> : vector<8x8xf32>
    %157 = tpu.matmul %154, %155, %cst_55 {dimension_numbers = #tpu.dot_dimension_numbers<[1], [1], [0], [0], [0, 0, 1, 0], [], []>} : vector<8x8xbf16>, vector<8x8xbf16>, vector<8x8xf32> -> vector<8x8xf32>
    %cst_56 = arith.constant 0.353553385 : f32
    %158 = vector.broadcast %cst_56 : f32 to vector<8x8xf32>
    %159 = arith.mulf %157, %158 : vector<8x8xf32>
    %160 = arith.addf %159, %113 : vector<8x8xf32>
    %cst_57 = arith.constant dense<0xFF800000> : vector<8xf32>
    %161 = vector.multi_reduction <maximumf>, %160, %cst_57 [1] : vector<8x8xf32> to vector<8xf32>
    %162 = vector.shape_cast %161 : vector<8xf32> to vector<8x1xf32>
    %163 = vector.broadcast %162 : vector<8x1xf32> to vector<8x8xf32>
    %164 = arith.subf %160, %163 : vector<8x8xf32>
    %165 = math.exp %164 : vector<8x8xf32>
    %cst_58 = arith.constant dense<0.000000e+00> : vector<8xf32>
    %166 = vector.multi_reduction <add>, %165, %cst_58 [1] : vector<8x8xf32> to vector<8xf32>
    %167 = vector.shape_cast %166 : vector<8xf32> to vector<8x1xf32>
    %168 = tpu.reciprocal %167 {approx = true} : vector<8x1xf32> -> vector<8x1xf32>
    %169 = vector.broadcast %168 : vector<8x1xf32> to vector<8x8xf32>
    %170 = arith.mulf %165, %169 : vector<8x8xf32>
    %171 = arith.truncf %170 : vector<8x8xf32> to vector<8x8xbf16>
    %cst_59 = arith.constant dense<0.000000e+00> : vector<8x8xf32>
    %172 = tpu.matmul %171, %156, %cst_59 {dimension_numbers = #tpu.dot_dimension_numbers<[1], [0], [0], [1], [0, 0, 1, 1], [], []>} : vector<8x8xbf16>, vector<8x8xbf16>, vector<8x8xf32> -> vector<8x8xf32>
    %c8_60 = arith.constant 8 : index
    %c16_61 = arith.constant 16 : index
    %173 = vector.load %arg6[%c8_60, %c16_61] : memref<16x32xf32, #tpu.memory_space<vmem>>, vector<8x8xf32>
    tpu.vector_store %arg6[%c8_60, %c16_61], %172 {strides = array<i32>} : memref<16x32xf32, #tpu.memory_space<vmem>>, vector<8x8xf32>,
    %174 = vector.extract_strided_slice %112 {offsets = [0, 24], sizes = [8, 8], strides = [1, 1]} : vector<8x96xbf16> to vector<8x8xbf16>
    %175 = vector.extract_strided_slice %112 {offsets = [0, 56], sizes = [8, 8], strides = [1, 1]} : vector<8x96xbf16> to vector<8x8xbf16>
    %176 = vector.extract_strided_slice %112 {offsets = [0, 88], sizes = [8, 8], strides = [1, 1]} : vector<8x96xbf16> to vector<8x8xbf16>
    %cst_62 = arith.constant dense<0.000000e+00> : vector<8x8xf32>
    %177 = tpu.matmul %174, %175, %cst_62 {dimension_numbers = #tpu.dot_dimension_numbers<[1], [1], [0], [0], [0, 0, 1, 0], [], []>} : vector<8x8xbf16>, vector<8x8xbf16>, vector<8x8xf32> -> vector<8x8xf32>
    %cst_63 = arith.constant 0.353553385 : f32
    %178 = vector.broadcast %cst_63 : f32 to vector<8x8xf32>
    %179 = arith.mulf %177, %178 : vector<8x8xf32>
    %180 = arith.addf %179, %113 : vector<8x8xf32>
    %cst_64 = arith.constant dense<0xFF800000> : vector<8xf32>
    %181 = vector.multi_reduction <maximumf>, %180, %cst_64 [1] : vector<8x8xf32> to vector<8xf32>
    %182 = vector.shape_cast %181 : vector<8xf32> to vector<8x1xf32>
    %183 = vector.broadcast %182 : vector<8x1xf32> to vector<8x8xf32>
    %184 = arith.subf %180, %183 : vector<8x8xf32>
    %185 = math.exp %184 : vector<8x8xf32>
    %cst_65 = arith.constant dense<0.000000e+00> : vector<8xf32>
    %186 = vector.multi_reduction <add>, %185, %cst_65 [1] : vector<8x8xf32> to vector<8xf32>
    %187 = vector.shape_cast %186 : vector<8xf32> to vector<8x1xf32>
    %188 = tpu.reciprocal %187 {approx = true} : vector<8x1xf32> -> vector<8x1xf32>
    %189 = vector.broadcast %188 : vector<8x1xf32> to vector<8x8xf32>
    %190 = arith.mulf %185, %189 : vector<8x8xf32>
    %191 = arith.truncf %190 : vector<8x8xf32> to vector<8x8xbf16>
    %cst_66 = arith.constant dense<0.000000e+00> : vector<8x8xf32>
    %192 = tpu.matmul %191, %176, %cst_66 {dimension_numbers = #tpu.dot_dimension_numbers<[1], [0], [0], [1], [0, 0, 1, 1], [], []>} : vector<8x8xbf16>, vector<8x8xbf16>, vector<8x8xf32> -> vector<8x8xf32>
    %c8_67 = arith.constant 8 : index
    %c24_68 = arith.constant 24 : index
    %193 = vector.load %arg6[%c8_67, %c24_68] : memref<16x32xf32, #tpu.memory_space<vmem>>, vector<8x8xf32>
    tpu.vector_store %arg6[%c8_67, %c24_68], %192 {strides = array<i32>} : memref<16x32xf32, #tpu.memory_space<vmem>>, vector<8x8xf32>,
    %c0_69 = arith.constant 0 : index
    %c0_70 = arith.constant 0 : index
    %194 = vector.load %arg6[%c0_69, %c0_70] : memref<16x32xf32, #tpu.memory_space<vmem>>, vector<16x32xf32>
    %195 = arith.truncf %194 : vector<16x32xf32> to vector<16x32xbf16>
    %cst_71 = arith.constant dense<0.000000e+00> : vector<16x32xf32>
    %196 = tpu.matmul %195, %4, %cst_71 {dimension_numbers = #tpu.dot_dimension_numbers<[1], [0], [0], [1], [0, 0, 1, 1], [], []>} : vector<16x32xbf16>, vector<32x32xbf16>, vector<16x32xf32> -> vector<16x32xf32>
    %197 = vector.broadcast %13 : vector<1x32xf32> to vector<16x32xf32>
    %198 = arith.addf %196, %197 : vector<16x32xf32>
    %199 = arith.addf %0, %198 : vector<16x32xf32>
    %cst_72 = arith.constant dense<0.000000e+00> : vector<16xf32>
    %200 = vector.multi_reduction <add>, %199, %cst_72 [1] : vector<16x32xf32> to vector<16xf32>
    %201 = vector.shape_cast %200 : vector<16xf32> to vector<16x1xf32>
    %cst_73 = arith.constant 3.200000e+01 : f32
    %202 = vector.broadcast %cst_73 : f32 to vector<16x1xf32>
    %203 = arith.divf %201, %202 : vector<16x1xf32>
    %204 = vector.broadcast %203 : vector<16x1xf32> to vector<16x32xf32>
    %205 = arith.subf %199, %204 : vector<16x32xf32>
    %206 = arith.mulf %205, %205 : vector<16x32xf32>
    %cst_74 = arith.constant dense<0.000000e+00> : vector<16xf32>
    %207 = vector.multi_reduction <add>, %206, %cst_74 [1] : vector<16x32xf32> to vector<16xf32>
    %208 = vector.shape_cast %207 : vector<16xf32> to vector<16x1xf32>
    %cst_75 = arith.constant 3.200000e+01 : f32
    %209 = vector.broadcast %cst_75 : f32 to vector<16x1xf32>
    %210 = arith.divf %208, %209 : vector<16x1xf32>
    %cst_76 = arith.constant 9.99999974E-6 : f32
    %211 = vector.broadcast %cst_76 : f32 to vector<16x1xf32>
    %212 = arith.addf %210, %211 : vector<16x1xf32>
    %213 = math.rsqrt %212 : vector<16x1xf32>
    %214 = vector.broadcast %213 : vector<16x1xf32> to vector<16x32xf32>
    %215 = arith.mulf %205, %214 : vector<16x32xf32>
    %216 = vector.broadcast %16 : vector<1x32xf32> to vector<16x32xf32>
    %217 = arith.mulf %215, %216 : vector<16x32xf32>
    %218 = vector.broadcast %17 : vector<1x32xf32> to vector<16x32xf32>
    %219 = arith.addf %217, %218 : vector<16x32xf32>
    %220 = arith.truncf %219 : vector<16x32xf32> to vector<16x32xbf16>
    %cst_77 = arith.constant dense<0.000000e+00> : vector<16x64xf32>
    %221 = tpu.matmul %220, %5, %cst_77 {dimension_numbers = #tpu.dot_dimension_numbers<[1], [0], [0], [1], [0, 0, 1, 1], [], []>} : vector<16x32xbf16>, vector<32x64xbf16>, vector<16x64xf32> -> vector<16x64xf32>
    %222 = vector.broadcast %14 : vector<1x64xf32> to vector<16x64xf32>
    %223 = arith.addf %221, %222 : vector<16x64xf32>
    %cst_78 = arith.constant 0.000000e+00 : f32
    %224 = vector.broadcast %cst_78 : f32 to vector<16x64xf32>
    %225 = arith.maximumf %223, %224 : vector<16x64xf32>
    %226 = arith.truncf %225 : vector<16x64xf32> to vector<16x64xbf16>
    %cst_79 = arith.constant dense<0.000000e+00> : vector<16x32xf32>
    %227 = tpu.matmul %226, %6, %cst_79 {dimension_numbers = #tpu.dot_dimension_numbers<[1], [0], [0], [1], [0, 0, 1, 1], [], []>} : vector<16x64xbf16>, vector<64x32xbf16>, vector<16x32xf32> -> vector<16x32xf32>
    %228 = vector.broadcast %15 : vector<1x32xf32> to vector<16x32xf32>
    %229 = arith.addf %227, %228 : vector<16x32xf32>
    %230 = arith.addf %219, %229 : vector<16x32xf32>
    %cst_80 = arith.constant dense<0.000000e+00> : vector<16xf32>
    %231 = vector.multi_reduction <add>, %230, %cst_80 [1] : vector<16x32xf32> to vector<16xf32>
    %232 = vector.shape_cast %231 : vector<16xf32> to vector<16x1xf32>
    %cst_81 = arith.constant 3.200000e+01 : f32
    %233 = vector.broadcast %cst_81 : f32 to vector<16x1xf32>
    %234 = arith.divf %232, %233 : vector<16x1xf32>
    %235 = vector.broadcast %234 : vector<16x1xf32> to vector<16x32xf32>
    %236 = arith.subf %230, %235 : vector<16x32xf32>
    %237 = arith.mulf %236, %236 : vector<16x32xf32>
    %cst_82 = arith.constant dense<0.000000e+00> : vector<16xf32>
    %238 = vector.multi_reduction <add>, %237, %cst_82 [1] : vector<16x32xf32> to vector<16xf32>
    %239 = vector.shape_cast %238 : vector<16xf32> to vector<16x1xf32>
    %cst_83 = arith.constant 3.200000e+01 : f32
    %240 = vector.broadcast %cst_83 : f32 to vector<16x1xf32>
    %241 = arith.divf %239, %240 : vector<16x1xf32>
    %cst_84 = arith.constant 9.99999974E-6 : f32
    %242 = vector.broadcast %cst_84 : f32 to vector<16x1xf32>
    %243 = arith.addf %241, %242 : vector<16x1xf32>
    %244 = math.rsqrt %243 : vector<16x1xf32>
    %245 = vector.broadcast %244 : vector<16x1xf32> to vector<16x32xf32>
    %246 = arith.mulf %236, %245 : vector<16x32xf32>
    %247 = vector.broadcast %18 : vector<1x32xf32> to vector<16x32xf32>
    %248 = arith.mulf %246, %247 : vector<16x32xf32>
    %249 = vector.broadcast %19 : vector<1x32xf32> to vector<16x32xf32>
    %250 = arith.addf %248, %249 : vector<16x32xf32>
    %251 = arith.mulf %250, %1 : vector<16x32xf32>
    %252 = arith.truncf %251 : vector<16x32xf32> to vector<16x32xbf16>
    %cst_85 = arith.constant dense<0.000000e+00> : vector<16x64xf32>
    %253 = tpu.matmul %252, %7, %cst_85 {dimension_numbers = #tpu.dot_dimension_numbers<[1], [0], [0], [1], [0, 0, 1, 1], [], []>} : vector<16x32xbf16>, vector<32x64xbf16>, vector<16x64xf32> -> vector<16x64xf32>
    %254 = vector.broadcast %20 : vector<1x64xf32> to vector<16x64xf32>
    %255 = arith.addf %253, %254 : vector<16x64xf32>
    %cst_86 = arith.constant 0.000000e+00 : f32
    %256 = vector.broadcast %cst_86 : f32 to vector<16x64xf32>
    %257 = arith.maximumf %255, %256 : vector<16x64xf32>
    %258 = arith.truncf %257 : vector<16x64xf32> to vector<16x64xbf16>
    %cst_87 = arith.constant dense<0.000000e+00> : vector<16x32xf32>
    %259 = tpu.matmul %258, %8, %cst_87 {dimension_numbers = #tpu.dot_dimension_numbers<[1], [0], [0], [1], [0, 0, 1, 1], [], []>} : vector<16x64xbf16>, vector<64x32xbf16>, vector<16x32xf32> -> vector<16x32xf32>
    %260 = vector.broadcast %21 : vector<1x32xf32> to vector<16x32xf32>
    %261 = arith.addf %259, %260 : vector<16x32xf32>
    %262 = vector.extract_strided_slice %261 {offsets = [0, 0], sizes = [8, 32], strides = [1, 1]} : vector<16x32xf32> to vector<8x32xf32>
    %263 = arith.truncf %262 : vector<8x32xf32> to vector<8x32xbf16>
    %cst_88 = arith.constant dense<0.000000e+00> : vector<8x8xf32>
    %264 = tpu.matmul %263, %263, %cst_88 {dimension_numbers = #tpu.dot_dimension_numbers<[1], [1], [0], [0], [0, 0, 1, 0], [], []>} : vector<8x32xbf16>, vector<8x32xbf16>, vector<8x8xf32> -> vector<8x8xf32>
    %cst_89 = arith.constant 0.176776692 : f32
    %265 = vector.broadcast %cst_89 : f32 to vector<8x8xf32>
    %266 = arith.mulf %264, %265 : vector<8x8xf32>
    %267 = vector.extract_strided_slice %2 {offsets = [0, 0], sizes = [8, 8], strides = [1, 1]} : vector<16x8xf32> to vector<8x8xf32>
    %268 = arith.addf %266, %267 : vector<8x8xf32>
    %cst_90 = arith.constant dense<0xFF800000> : vector<8xf32>
    %269 = vector.multi_reduction <maximumf>, %268, %cst_90 [1] : vector<8x8xf32> to vector<8xf32>
    %270 = vector.shape_cast %269 : vector<8xf32> to vector<8x1xf32>
    %271 = vector.broadcast %270 : vector<8x1xf32> to vector<8x8xf32>
    %272 = arith.subf %268, %271 : vector<8x8xf32>
    %273 = math.exp %272 : vector<8x8xf32>
    %cst_91 = arith.constant dense<0.000000e+00> : vector<8xf32>
    %274 = vector.multi_reduction <add>, %273, %cst_91 [1] : vector<8x8xf32> to vector<8xf32>
    %275 = vector.shape_cast %274 : vector<8xf32> to vector<8x1xf32>
    %276 = tpu.reciprocal %275 {approx = true} : vector<8x1xf32> -> vector<8x1xf32>
    %277 = vector.broadcast %276 : vector<8x1xf32> to vector<8x8xf32>
    %278 = arith.mulf %273, %277 : vector<8x8xf32>
    %279 = arith.truncf %278 : vector<8x8xf32> to vector<8x8xbf16>
    %cst_92 = arith.constant dense<0.000000e+00> : vector<8x64xf32>
    %280 = tpu.matmul %263, %9, %cst_92 {dimension_numbers = #tpu.dot_dimension_numbers<[1], [0], [0], [1], [0, 0, 1, 1], [], []>} : vector<8x32xbf16>, vector<32x64xbf16>, vector<8x64xf32> -> vector<8x64xf32>
    %281 = vector.broadcast %22 : vector<1x64xf32> to vector<8x64xf32>
    %282 = arith.addf %280, %281 : vector<8x64xf32>
    %283 = arith.truncf %282 : vector<8x64xf32> to vector<8x64xbf16>
    %cst_93 = arith.constant dense<0.000000e+00> : vector<8x64xf32>
    %284 = tpu.matmul %279, %283, %cst_93 {dimension_numbers = #tpu.dot_dimension_numbers<[1], [0], [0], [1], [0, 0, 1, 1], [], []>} : vector<8x8xbf16>, vector<8x64xbf16>, vector<8x64xf32> -> vector<8x64xf32>
    %cst_94 = arith.constant 0.000000e+00 : f32
    %285 = vector.broadcast %cst_94 : f32 to vector<8x64xf32>
    %286 = arith.maximumf %284, %285 : vector<8x64xf32>
    %287 = arith.truncf %286 : vector<8x64xf32> to vector<8x64xbf16>
    %cst_95 = arith.constant dense<0.000000e+00> : vector<8x32xf32>
    %288 = tpu.matmul %287, %10, %cst_95 {dimension_numbers = #tpu.dot_dimension_numbers<[1], [0], [0], [1], [0, 0, 1, 1], [], []>} : vector<8x64xbf16>, vector<64x32xbf16>, vector<8x32xf32> -> vector<8x32xf32>
    %289 = vector.broadcast %23 : vector<1x32xf32> to vector<8x32xf32>
    %290 = arith.addf %288, %289 : vector<8x32xf32>
    %291 = arith.truncf %290 : vector<8x32xf32> to vector<8x32xbf16>
    %cst_96 = arith.constant dense<0.000000e+00> : vector<8x32xf32>
    %292 = tpu.matmul %279, %291, %cst_96 {dimension_numbers = #tpu.dot_dimension_numbers<[1], [0], [0], [1], [0, 0, 1, 1], [], []>} : vector<8x8xbf16>, vector<8x32xbf16>, vector<8x32xf32> -> vector<8x32xf32>
    %293 = vector.extract_strided_slice %251 {offsets = [0, 0], sizes = [8, 32], strides = [1, 1]} : vector<16x32xf32> to vector<8x32xf32>
    %294 = vector.extract_strided_slice %1 {offsets = [0, 0], sizes = [8, 32], strides = [1, 1]} : vector<16x32xf32> to vector<8x32xf32>
    %295 = arith.mulf %292, %294 : vector<8x32xf32>
    %296 = arith.addf %293, %295 : vector<8x32xf32>
    %c0_97 = arith.constant 0 : index
    %c0_98 = arith.constant 0 : index
    %297 = vector.load %arg5[%c0_97, %c0_98] : memref<16x32xf32, #tpu.memory_space<vmem>>, vector<8x32xf32>
    tpu.vector_store %arg5[%c0_97, %c0_98], %296 {strides = array<i32>} : memref<16x32xf32, #tpu.memory_space<vmem>>, vector<8x32xf32>,
    %298 = vector.extract_strided_slice %261 {offsets = [8, 0], sizes = [8, 32], strides = [1, 1]} : vector<16x32xf32> to vector<8x32xf32>
    %299 = arith.truncf %298 : vector<8x32xf32> to vector<8x32xbf16>
    %cst_99 = arith.constant dense<0.000000e+00> : vector<8x8xf32>
    %300 = tpu.matmul %299, %299, %cst_99 {dimension_numbers = #tpu.dot_dimension_numbers<[1], [1], [0], [0], [0, 0, 1, 0], [], []>} : vector<8x32xbf16>, vector<8x32xbf16>, vector<8x8xf32> -> vector<8x8xf32>
    %cst_100 = arith.constant 0.176776692 : f32
    %301 = vector.broadcast %cst_100 : f32 to vector<8x8xf32>
    %302 = arith.mulf %300, %301 : vector<8x8xf32>
    %303 = vector.extract_strided_slice %2 {offsets = [8, 0], sizes = [8, 8], strides = [1, 1]} : vector<16x8xf32> to vector<8x8xf32>
    %304 = arith.addf %302, %303 : vector<8x8xf32>
    %cst_101 = arith.constant dense<0xFF800000> : vector<8xf32>
    %305 = vector.multi_reduction <maximumf>, %304, %cst_101 [1] : vector<8x8xf32> to vector<8xf32>
    %306 = vector.shape_cast %305 : vector<8xf32> to vector<8x1xf32>
    %307 = vector.broadcast %306 : vector<8x1xf32> to vector<8x8xf32>
    %308 = arith.subf %304, %307 : vector<8x8xf32>
    %309 = math.exp %308 : vector<8x8xf32>
    %cst_102 = arith.constant dense<0.000000e+00> : vector<8xf32>
    %310 = vector.multi_reduction <add>, %309, %cst_102 [1] : vector<8x8xf32> to vector<8xf32>
    %311 = vector.shape_cast %310 : vector<8xf32> to vector<8x1xf32>
    %312 = tpu.reciprocal %311 {approx = true} : vector<8x1xf32> -> vector<8x1xf32>
    %313 = vector.broadcast %312 : vector<8x1xf32> to vector<8x8xf32>
    %314 = arith.mulf %309, %313 : vector<8x8xf32>
    %315 = arith.truncf %314 : vector<8x8xf32> to vector<8x8xbf16>
    %cst_103 = arith.constant dense<0.000000e+00> : vector<8x64xf32>
    %316 = tpu.matmul %299, %9, %cst_103 {dimension_numbers = #tpu.dot_dimension_numbers<[1], [0], [0], [1], [0, 0, 1, 1], [], []>} : vector<8x32xbf16>, vector<32x64xbf16>, vector<8x64xf32> -> vector<8x64xf32>
    %317 = vector.broadcast %22 : vector<1x64xf32> to vector<8x64xf32>
    %318 = arith.addf %316, %317 : vector<8x64xf32>
    %319 = arith.truncf %318 : vector<8x64xf32> to vector<8x64xbf16>
    %cst_104 = arith.constant dense<0.000000e+00> : vector<8x64xf32>
    %320 = tpu.matmul %315, %319, %cst_104 {dimension_numbers = #tpu.dot_dimension_numbers<[1], [0], [0], [1], [0, 0, 1, 1], [], []>} : vector<8x8xbf16>, vector<8x64xbf16>, vector<8x64xf32> -> vector<8x64xf32>
    %cst_105 = arith.constant 0.000000e+00 : f32
    %321 = vector.broadcast %cst_105 : f32 to vector<8x64xf32>
    %322 = arith.maximumf %320, %321 : vector<8x64xf32>
    %323 = arith.truncf %322 : vector<8x64xf32> to vector<8x64xbf16>
    %cst_106 = arith.constant dense<0.000000e+00> : vector<8x32xf32>
    %324 = tpu.matmul %323, %10, %cst_106 {dimension_numbers = #tpu.dot_dimension_numbers<[1], [0], [0], [1], [0, 0, 1, 1], [], []>} : vector<8x64xbf16>, vector<64x32xbf16>, vector<8x32xf32> -> vector<8x32xf32>
    %325 = vector.broadcast %23 : vector<1x32xf32> to vector<8x32xf32>
    %326 = arith.addf %324, %325 : vector<8x32xf32>
    %327 = arith.truncf %326 : vector<8x32xf32> to vector<8x32xbf16>
    %cst_107 = arith.constant dense<0.000000e+00> : vector<8x32xf32>
    %328 = tpu.matmul %315, %327, %cst_107 {dimension_numbers = #tpu.dot_dimension_numbers<[1], [0], [0], [1], [0, 0, 1, 1], [], []>} : vector<8x8xbf16>, vector<8x32xbf16>, vector<8x32xf32> -> vector<8x32xf32>
    %329 = vector.extract_strided_slice %251 {offsets = [8, 0], sizes = [8, 32], strides = [1, 1]} : vector<16x32xf32> to vector<8x32xf32>
    %330 = vector.extract_strided_slice %1 {offsets = [8, 0], sizes = [8, 32], strides = [1, 1]} : vector<16x32xf32> to vector<8x32xf32>
    %331 = arith.mulf %328, %330 : vector<8x32xf32>
    %332 = arith.addf %329, %331 : vector<8x32xf32>
    %c8_108 = arith.constant 8 : index
    %c0_109 = arith.constant 0 : index
    %333 = vector.load %arg5[%c8_108, %c0_109] : memref<16x32xf32, #tpu.memory_space<vmem>>, vector<8x32xf32>
    tpu.vector_store %arg5[%c8_108, %c0_109], %332 {strides = array<i32>} : memref<16x32xf32, #tpu.memory_space<vmem>>, vector<8x32xf32>,
    return
  }
}

</mosaic_0001>

<llo_original>
// kernel: custom_transformer_encoder.1
$region0: #{custom_transformer_encoder.1}
  #allocation0 [shape = 'u32[]', space=smem, size = 0x4, offset = 0x4, fixed_abs, tag = 'smem constant byte address 0x4 - core index']
  #allocation1 [shape = 'u32[144,128]{1,0:T(1,128)}', space=vmem, size = 0x12000, scoped, tag = 'internal scratch']
  #allocation2 [shape = 'f32[16,32]{1,0:T(8,128)}', space=vmem, size = 0x2000, scoped, tag = 'scratch operand']
  %s0 = inlined_call_operand.vmem [shape: f32[16,32], index: 0, kind: input, shape index: {}]
  %s1 = inlined_call_operand.vmem [shape: f32[16,32], index: 1, kind: input, shape index: {}]
  %s2 = inlined_call_operand.vmem [shape: f32[16,8], index: 2, kind: input, shape index: {}]
  %s3 = inlined_call_operand.vmem [shape: bf16[352,96], index: 3, kind: input, shape index: {}]
  %s4 = inlined_call_operand.vmem [shape: f32[12,96], index: 4, kind: input, shape index: {}]
  %s5 = inlined_call_operand.hbm [shape: f32[16,32], index: 5, kind: output, shape index: {}]
  %s6 = sld [smem:[#allocation0]]
  $region30: #{custom_transformer_encoder.1} parent=0
    _
  %s8 = ssub.s32 1, %s6
  %s9 = scalar_select 0, %s8, %s6
  $region1: #{custom_transformer_encoder.1} parent=0
    #allocation3 [shape = 'u8[8192]{0}', space=vmem, size = 0x2000, scoped, tag = 'output window, operand 0, single buffered']
    #allocation4 [shape = 's32[1]{0}', space=sflag, size = 0x4, scoped, tag = 'scoped memory for custom_transformer_encoder.1']
    %10 = vsyncpa [#allocation4], 0
    // Predicated region
    $region2: #{custom_transformer_encoder.1} parent=1 // pred_check
      _
    $region3: #{custom_transformer_encoder.1} parent=1 // pred_check_branch
      %12 = sbr.rel (0) target = $region5
    $region4: #{custom_transformer_encoder.1} parent=1 // pred_region
      _
    $region5: #{custom_transformer_encoder.1} parent=1 // pred_fallthru
      _
    // Predicated region
    $region6: #{custom_transformer_encoder.1} parent=1 // pred_check
      _
    $region7: #{custom_transformer_encoder.1} parent=1 // pred_check_branch
      %14 = sbr.rel (0) target = $region9
    $region8: #{custom_transformer_encoder.1} parent=1 // pred_region
      _
    $region9: #{custom_transformer_encoder.1} parent=1 // pred_fallthru
      _
    // Predicated region
    $region10: #{custom_transformer_encoder.1} parent=1 // pred_check
      _
    $region11: #{custom_transformer_encoder.1} parent=1 // pred_check_branch
      %16 = sbr.rel (0) target = $region13
    $region12: #{custom_transformer_encoder.1} parent=1 // pred_region
      _
    $region13: #{custom_transformer_encoder.1} parent=1 // pred_fallthru
      _
    // Predicated region
    $region14: #{custom_transformer_encoder.1} parent=1 // pred_check
      _
    $region15: #{custom_transformer_encoder.1} parent=1 // pred_check_branch
      %18 = sbr.rel (0) target = $region17
    $region16: #{custom_transformer_encoder.1} parent=1 // pred_region
      _
    $region17: #{custom_transformer_encoder.1} parent=1 // pred_fallthru
      _
    // Predicated region
    $region18: #{custom_transformer_encoder.1} parent=1 // pred_check
      _
    $region19: #{custom_transformer_encoder.1} parent=1 // pred_check_branch
      %20 = sbr.rel (0) target = $region21
    $region20: #{custom_transformer_encoder.1} parent=1 // pred_region
      _
    $region21: #{custom_transformer_encoder.1} parent=1 // pred_fallthru
      _
    %v22 = vld [vmem:[%s0] sm:$0xff]
    %v23 = vld [vmem:[%s0 + $0x8] sm:$0xff]
    %v24 = vld [vmem:[%s1] sm:$0xff]
    %v25 = vld [vmem:[%s1 + $0x8] sm:$0xff]
    %v26 = vld [vmem:[%s2] sm:$0xff]
    %v27 = vld [vmem:[%s2 + $0x8] sm:$0xff]
    %v28 = vld [vmem:[%s3] sm:$0xf]
    %v29 = vld [vmem:[%s3 + $0x4] sm:$0xf]
    %v30 = vld [vmem:[%s3 + $0x8] sm:$0xf]
    %v31 = vld [vmem:[%s3 + $0xc] sm:$0xf]
    %v32 = vld [vmem:[%s3 + $0x10] sm:$0xf]
    %v33 = vld [vmem:[%s3 + $0x14] sm:$0xf]
    %v34 = vld [vmem:[%s3 + $0x18] sm:$0xf]
    %v35 = vld [vmem:[%s3 + $0x1c] sm:$0xf]
    %v36 = vld [vmem:[%s3 + $0x20] sm:$0xf]
    %v37 = vld [vmem:[%s3 + $0x24] sm:$0xf]
    %v38 = vld [vmem:[%s3 + $0x28] sm:$0xf]
    %v39 = vld [vmem:[%s3 + $0x2c] sm:$0xf]
    %v40 = vld [vmem:[%s3 + $0x30] sm:$0xf]
    %v41 = vld [vmem:[%s3 + $0x34] sm:$0xf]
    %v42 = vld [vmem:[%s3 + $0x38] sm:$0xf]
    %v43 = vld [vmem:[%s3 + $0x3c] sm:$0xf]
    %v44 = vld [vmem:[%s3 + $0x40] sm:$0xf]
    %v45 = vld [vmem:[%s3 + $0x44] sm:$0xf]
    %v46 = vld [vmem:[%s3 + $0x48] sm:$0xf]
    %v47 = vld [vmem:[%s3 + $0x4c] sm:$0xf]
    %v48 = vld [vmem:[%s3 + $0x50] sm:$0xf]
    %v49 = vld [vmem:[%s3 + $0x54] sm:$0xf]
    %v50 = vld [vmem:[%s3 + $0x58] sm:$0xf]
    %v51 = vld [vmem:[%s3 + $0x5c] sm:$0xf]
    %v52 = vld [vmem:[%s3 + $0x60] sm:$0xf]
    %v53 = vld [vmem:[%s3 + $0x64] sm:$0xf]
    %v54 = vld [vmem:[%s3 + $0x68] sm:$0xf]
    %v55 = vld [vmem:[%s3 + $0x6c] sm:$0xf]
    %v56 = vld [vmem:[%s3 + $0x70] sm:$0xf]
    %v57 = vld [vmem:[%s3 + $0x74] sm:$0xf]
    %v58 = vld [vmem:[%s3 + $0x78] sm:$0xf]
    %v59 = vld [vmem:[%s3 + $0x7c] sm:$0xf]
    %v60 = vld [vmem:[%s3 + $0x80] sm:$0xf]
    %v61 = vld [vmem:[%s3 + $0x84] sm:$0xf]
    %v62 = vld [vmem:[%s3 + $0x88] sm:$0xf]
    %v63 = vld [vmem:[%s3 + $0x8c] sm:$0xf]
    %v64 = vld [vmem:[%s3 + $0x90] sm:$0xf]
    %v65 = vld [vmem:[%s3 + $0x94] sm:$0xf]
    %v66 = vld [vmem:[%s3 + $0x98] sm:$0xf]
    %v67 = vld [vmem:[%s3 + $0x9c] sm:$0xf]
    %v68 = vld [vmem:[%s3 + $0xa0] sm:$0xf]
    %v69 = vld [vmem:[%s3 + $0xa4] sm:$0xf]
    %v70 = vld [vmem:[%s3 + $0xa8] sm:$0xf]
    %v71 = vld [vmem:[%s3 + $0xac] sm:$0xf]
    %v72 = vld [vmem:[%s4] sm:$0xff]
    %v73 = vld [vmem:[%s4 + $0x8] sm:$0xf]
    %v74 = vpack.c.bf16 %v23, %v22
    %v75 = vlaneseq
    %v76 = vshrl.u32 %v75, 7
    %v77 = vsub.s32 0, %v76
    %v78 = vrot.slane %v72, %v77
    %v83 = vunpack.c.l.b16 %v28
    %v84 = vunpack.c.l.b16 %v29
    %v85 = vunpack.c.l.b16 %v30
    %v86 = vunpack.c.l.b16 %v31
    %v87 = vpack.c.b16 %v84, %v83
    %v88 = vpack.c.b16 %v86, %v85
    %vm91 = vcmask 261120
    %v93 = vsel %vm91, %v74, 0
    %95 = vmatprep.subr.bf16.mxu0 0
    %96 = vmatpush1.bf16.msra.mxu0 %v87
    %97 = vmatprep.subr.bf16.mxu0 0
    %98 = vmatpush1.bf16.msra.mxu0 %v88
    %99 = vmatprep.subr.bf16.mxu0 0
    %100 = vmatpush1.bf16.msra.mxu0 0
    %101 = vmatprep.subr.bf16.mxu0 0
    %102 = vmatpush1.bf16.msra.mxu0 0
    %103 = vmatprep.subr.bf16.mxu0 0
    %104 = vmatpush1.bf16.msra.mxu0 0
    %105 = vmatprep.subr.bf16.mxu0 0
    %106 = vmatpush1.bf16.msra.mxu0 0
    %107 = vmatprep.subr.bf16.mxu0 0
    %108 = vmatpush1.bf16.msra.mxu0 0
    %109 = vmatprep.subr.bf16.mxu0 0
    %110 = vmatpush1.bf16.msra.mxu0 0
    %111 = vmatprep.subr.bf16.mxu0 0
    %112 = vmatpush1.bf16.msra.mxu0 0
    %113 = vmatprep.subr.bf16.mxu0 0
    %114 = vmatpush1.bf16.msra.mxu0 0
    %115 = vmatprep.subr.bf16.mxu0 0
    %116 = vmatpush1.bf16.msra.mxu0 0
    %117 = vmatprep.subr.bf16.mxu0 0
    %118 = vmatpush1.bf16.msra.mxu0 0
    %119 = vmatprep.subr.bf16.mxu0 0
    %120 = vmatpush1.bf16.msra.mxu0 0
    %121 = vmatprep.subr.bf16.mxu0 0
    %122 = vmatpush1.bf16.msra.mxu0 0
    %123 = vmatprep.subr.bf16.mxu0 0
    %124 = vmatpush1.bf16.msra.mxu0 0
    %125 = vmatprep.subr.bf16.mxu0 0
    %126 = vmatpush1.bf16.msra.mxu0 0
    %127 = vmatprep.mubr.bf16.mxu0 0
    %128 = vmatmul.mubr.bf16.gmra.mrb[0].mxu0 %v93
    %v129 = vpop.f32.mrb[0].mxu0
    %v130 = vadd.f32 %v78, %v129
    %v131 = vpop.f32.mrb[0].mxu0
    %v132 = vpop.f32.mrb[0].mxu0
    %v133 = vadd.f32 %v78, %v132
    %v134 = vpop.f32.mrb[0].mxu0
    %135 = vdwg.mxu0
    %v136 = vpack.c.bf16 %v130, %v130
    %138 = vrot.lane.b32.xlu0 %v136, 96
    %v139 = vpop.permute.xlu0 %138
    %vm140 = vcmask 64512
    %v142 = vsel %vm140, %v136, 0
    %v145 = vsel %vm140, %v139, 0
    %147 = vmatprep.subr.bf16.mxu0 0
    %148 = vmatpush1.bf16.xpose.msra.mxu0 %v145
    %149 = vmatprep.subr.bf16.mxu0 0
    %150 = vmatpush1.bf16.xpose.msra.mxu0 0
    %151 = vmatprep.subr.bf16.mxu0 0
    %152 = vmatpush1.bf16.xpose.msra.mxu0 0
    %153 = vmatprep.subr.bf16.mxu0 0
    %154 = vmatpush1.bf16.xpose.msra.mxu0 0
    %155 = vmatprep.subr.bf16.mxu0 0
    %156 = vmatpush1.bf16.xpose.msra.mxu0 0
    %157 = vmatprep.subr.bf16.mxu0 0
    %158 = vmatpush1.bf16.xpose.msra.mxu0 0
    %159 = vmatprep.subr.bf16.mxu0 0
    %160 = vmatpush1.bf16.xpose.msra.mxu0 0
    %161 = vmatprep.subr.bf16.mxu0 0
    %162 = vmatpush1.bf16.xpose.msra.mxu0 0
    %163 = vmatprep.subr.bf16.mxu0 0
    %164 = vmatpush1.bf16.xpose.msra.mxu0 0
    %165 = vmatprep.subr.bf16.mxu0 0
    %166 = vmatpush1.bf16.xpose.msra.mxu0 0
    %167 = vmatprep.subr.bf16.mxu0 0
    %168 = vmatpush1.bf16.xpose.msra.mxu0 0
    %169 = vmatprep.subr.bf16.mxu0 0
    %170 = vmatpush1.bf16.xpose.msra.mxu0 0
    %171 = vmatprep.subr.bf16.mxu0 0
    %172 = vmatpush1.bf16.xpose.msra.mxu0 0
    %173 = vmatprep.subr.bf16.mxu0 0
    %174 = vmatpush1.bf16.xpose.msra.mxu0 0
    %175 = vmatprep.subr.bf16.mxu0 0
    %176 = vmatpush1.bf16.xpose.msra.mxu0 0
    %177 = vmatprep.subr.bf16.mxu0 0
    %178 = vmatpush1.bf16.xpose.msra.mxu0 0
    %179 = vmatprep.mubr.bf16.mxu0 0
    %180 = vmatmul.mubr.bf16.gmra.mrb[0].mxu0 %v142
    %v181 = vpop.f32.mrb[0].mxu0
    %v182 = vadd.f32 0.0, %v181
    %v183 = vpop.f32.mrb[0].mxu0
    %v184 = vpop.f32.mrb[0].mxu0
    %v185 = vpop.f32.mrb[0].mxu0
    %186 = vdwg.mxu0
    %v187 = vmul.f32 %v182, 0.35355338
    %v188 = vadd.f32 %v187, %v26
    %v189 = vsel %vm140, %v188, -inf
    %190 = vmax.xlane.f32.xlu0 %v189
    %v191 = vpop.xlane.xlu0 %190
    %v192 = vsub.f32 %v188, %v191
    %v193 = vmul.f32 %v192, 1.442695
    %v194 = vpow.pop %v193
    %v195 = vsel %vm140, %v194, 0.0
    %196 = vadd.xlane.f32.xlu0 %v195
    %v197 = vpop.xlane.xlu0 %196
    %v198 = vrcp.pop %v197
    %v199 = vmul.f32 %v194, %v198
    %v200 = vpack.c.bf16 %v199, %v199
    %201 = vrot.lane.b32.xlu0 %v136, 64
    %v202 = vpop.permute.xlu0 %201
    %v204 = vsel %vm140, %v200, 0
    %vm206 = vcmask 1043456
    %v208 = vsel %vm206, %v202, 0
    %210 = vmatprep.subr.bf16.mxu0 0
    %211 = vmatpush1.bf16.msra.mxu0 %v208
    %212 = vmatprep.subr.bf16.mxu0 0
    %213 = vmatpush1.bf16.msra.mxu0 0
    %214 = vmatprep.subr.bf16.mxu0 0
    %215 = vmatpush1.bf16.msra.mxu0 0
    %216 = vmatprep.subr.bf16.mxu0 0
    %217 = vmatpush1.bf16.msra.mxu0 0
    %218 = vmatprep.subr.bf16.mxu0 0
    %219 = vmatpush1.bf16.msra.mxu0 0
    %220 = vmatprep.subr.bf16.mxu0 0
    %221 = vmatpush1.bf16.msra.mxu0 0
    %222 = vmatprep.subr.bf16.mxu0 0
    %223 = vmatpush1.bf16.msra.mxu0 0
    %224 = vmatprep.subr.bf16.mxu0 0
    %225 = vmatpush1.bf16.msra.mxu0 0
    %226 = vmatprep.subr.bf16.mxu0 0
    %227 = vmatpush1.bf16.msra.mxu0 0
    %228 = vmatprep.subr.bf16.mxu0 0
    %229 = vmatpush1.bf16.msra.mxu0 0
    %230 = vmatprep.subr.bf16.mxu0 0
    %231 = vmatpush1.bf16.msra.mxu0 0
    %232 = vmatprep.subr.bf16.mxu0 0
    %233 = vmatpush1.bf16.msra.mxu0 0
    %234 = vmatprep.subr.bf16.mxu0 0
    %235 = vmatpush1.bf16.msra.mxu0 0
    %236 = vmatprep.subr.bf16.mxu0 0
    %237 = vmatpush1.bf16.msra.mxu0 0
    %238 = vmatprep.subr.bf16.mxu0 0
    %239 = vmatpush1.bf16.msra.mxu0 0
    %240 = vmatprep.subr.bf16.mxu0 0
    %241 = vmatpush1.bf16.msra.mxu0 0
    %242 = vmatprep.mubr.bf16.mxu0 0
    %243 = vmatmul.mubr.bf16.gmra.mrb[0].mxu0 %v204
    %v244 = vpop.f32.mrb[0].mxu0
    %v245 = vadd.f32 0.0, %v244
    %v246 = vpop.f32.mrb[0].mxu0
    %v247 = vpop.f32.mrb[0].mxu0
    %v248 = vpop.f32.mrb[0].mxu0
    %249 = vdwg.mxu0
    %250 = vst.msk [vmem:[#allocation2] sm:$0xff] %vm140, %v245
    %251 = vrot.lane.b32.xlu0 %v136, 120
    %v252 = vpop.permute.xlu0 %251
    %253 = vrot.lane.b32.xlu0 %v136, 88
    %v254 = vpop.permute.xlu0 %253
    %v256 = vsel %vm140, %v252, 0
    %v259 = vsel %vm140, %v254, 0
    %261 = vmatprep.subr.bf16.mxu0 0
    %262 = vmatpush1.bf16.xpose.msra.mxu0 %v259
    %263 = vmatprep.subr.bf16.mxu0 0
    %264 = vmatpush1.bf16.xpose.msra.mxu0 0
    %265 = vmatprep.subr.bf16.mxu0 0
    %266 = vmatpush1.bf16.xpose.msra.mxu0 0
    %267 = vmatprep.subr.bf16.mxu0 0
    %268 = vmatpush1.bf16.xpose.msra.mxu0 0
    %269 = vmatprep.subr.bf16.mxu0 0
    %270 = vmatpush1.bf16.xpose.msra.mxu0 0
    %271 = vmatprep.subr.bf16.mxu0 0
    %272 = vmatpush1.bf16.xpose.msra.mxu0 0
    %273 = vmatprep.subr.bf16.mxu0 0
    %274 = vmatpush1.bf16.xpose.msra.mxu0 0
    %275 = vmatprep.subr.bf16.mxu0 0
    %276 = vmatpush1.bf16.xpose.msra.mxu0 0
    %277 = vmatprep.subr.bf16.mxu0 0
    %278 = vmatpush1.bf16.xpose.msra.mxu0 0
    %279 = vmatprep.subr.bf16.mxu0 0
    %280 = vmatpush1.bf16.xpose.msra.mxu0 0
    %281 = vmatprep.subr.bf16.mxu0 0
    %282 = vmatpush1.bf16.xpose.msra.mxu0 0
    %283 = vmatprep.subr.bf16.mxu0 0
    %284 = vmatpush1.bf16.xpose.msra.mxu0 0
    %285 = vmatprep.subr.bf16.mxu0 0
    %286 = vmatpush1.bf16.xpose.msra.mxu0 0
    %287 = vmatprep.subr.bf16.mxu0 0
    %288 = vmatpush1.bf16.xpose.msra.mxu0 0
    %289 = vmatprep.subr.bf16.mxu0 0
    %290 = vmatpush1.bf16.xpose.msra.mxu0 0
    %291 = vmatprep.subr.bf16.mxu0 0
    %292 = vmatpush1.bf16.xpose.msra.mxu0 0
    %293 = vmatprep.mubr.bf16.mxu0 0
    %294 = vmatmul.mubr.bf16.gmra.mrb[0].mxu0 %v256
    %v295 = vpop.f32.mrb[0].mxu0
    %v296 = vadd.f32 0.0, %v295
    %v297 = vpop.f32.mrb[0].mxu0
    %v298 = vpop.f32.mrb[0].mxu0
    %v299 = vpop.f32.mrb[0].mxu0
    %300 = vdwg.mxu0
    %v301 = vmul.f32 %v296, 0.35355338
    %v302 = vadd.f32 %v301, %v26
    %v303 = vsel %vm140, %v302, -inf
    %304 = vmax.xlane.f32.xlu0 %v303
    %v305 = vpop.xlane.xlu0 %304
    %v306 = vsub.f32 %v302, %v305
    %v307 = vmul.f32 %v306, 1.442695
    %v308 = vpow.pop %v307
    %v309 = vsel %vm140, %v308, 0.0
    %310 = vadd.xlane.f32.xlu0 %v309
    %v311 = vpop.xlane.xlu0 %310
    %v312 = vrcp.pop %v311
    %v313 = vmul.f32 %v308, %v312
    %v314 = vpack.c.bf16 %v313, %v313
    %315 = vrot.lane.b32.xlu0 %v136, 56
    %v316 = vpop.permute.xlu0 %315
    %v318 = vsel %vm140, %v314, 0
    %v321 = vsel %vm206, %v316, 0
    %323 = vmatprep.subr.bf16.mxu0 0
    %324 = vmatpush1.bf16.msra.mxu0 %v321
    %325 = vmatprep.subr.bf16.mxu0 0
    %326 = vmatpush1.bf16.msra.mxu0 0
    %327 = vmatprep.subr.bf16.mxu0 0
    %328 = vmatpush1.bf16.msra.mxu0 0
    %329 = vmatprep.subr.bf16.mxu0 0
    %330 = vmatpush1.bf16.msra.mxu0 0
    %331 = vmatprep.subr.bf16.mxu0 0
    %332 = vmatpush1.bf16.msra.mxu0 0
    %333 = vmatprep.subr.bf16.mxu0 0
    %334 = vmatpush1.bf16.msra.mxu0 0
    %335 = vmatprep.subr.bf16.mxu0 0
    %336 = vmatpush1.bf16.msra.mxu0 0
    %337 = vmatprep.subr.bf16.mxu0 0
    %338 = vmatpush1.bf16.msra.mxu0 0
    %339 = vmatprep.subr.bf16.mxu0 0
    %340 = vmatpush1.bf16.msra.mxu0 0
    %341 = vmatprep.subr.bf16.mxu0 0
    %342 = vmatpush1.bf16.msra.mxu0 0
    %343 = vmatprep.subr.bf16.mxu0 0
    %344 = vmatpush1.bf16.msra.mxu0 0
    %345 = vmatprep.subr.bf16.mxu0 0
    %346 = vmatpush1.bf16.msra.mxu0 0
    %347 = vmatprep.subr.bf16.mxu0 0
    %348 = vmatpush1.bf16.msra.mxu0 0
    %349 = vmatprep.subr.bf16.mxu0 0
    %350 = vmatpush1.bf16.msra.mxu0 0
    %351 = vmatprep.subr.bf16.mxu0 0
    %352 = vmatpush1.bf16.msra.mxu0 0
    %353 = vmatprep.subr.bf16.mxu0 0
    %354 = vmatpush1.bf16.msra.mxu0 0
    %355 = vmatprep.mubr.bf16.mxu0 0
    %356 = vmatmul.mubr.bf16.gmra.mrb[0].mxu0 %v318
    %v357 = vpop.f32.mrb[0].mxu0
    %v358 = vadd.f32 0.0, %v357
    %v359 = vpop.f32.mrb[0].mxu0
    %v360 = vpop.f32.mrb[0].mxu0
    %v361 = vpop.f32.mrb[0].mxu0
    %362 = vdwg.mxu0
    %364 = vrot.lane.b32.xlu0 %v358, 8
    %v365 = vpop.permute.xlu0 %364
    %vm367 = vcmask 130112
    %368 = vst.msk [vmem:[#allocation2] sm:$0xff] %vm367, %v365
    %369 = vrot.lane.b32.xlu0 %v136, 112
    %v370 = vpop.permute.xlu0 %369
    %371 = vrot.lane.b32.xlu0 %v136, 80
    %v372 = vpop.permute.xlu0 %371
    %v374 = vsel %vm140, %v370, 0
    %v377 = vsel %vm140, %v372, 0
    %379 = vmatprep.subr.bf16.mxu0 0
    %380 = vmatpush1.bf16.xpose.msra.mxu0 %v377
    %381 = vmatprep.subr.bf16.mxu0 0
    %382 = vmatpush1.bf16.xpose.msra.mxu0 0
    %383 = vmatprep.subr.bf16.mxu0 0
    %384 = vmatpush1.bf16.xpose.msra.mxu0 0
    %385 = vmatprep.subr.bf16.mxu0 0
    %386 = vmatpush1.bf16.xpose.msra.mxu0 0
    %387 = vmatprep.subr.bf16.mxu0 0
    %388 = vmatpush1.bf16.xpose.msra.mxu0 0
    %389 = vmatprep.subr.bf16.mxu0 0
    %390 = vmatpush1.bf16.xpose.msra.mxu0 0
    %391 = vmatprep.subr.bf16.mxu0 0
    %392 = vmatpush1.bf16.xpose.msra.mxu0 0
    %393 = vmatprep.subr.bf16.mxu0 0
    %394 = vmatpush1.bf16.xpose.msra.mxu0 0
    %395 = vmatprep.subr.bf16.mxu0 0
    %396 = vmatpush1.bf16.xpose.msra.mxu0 0
    %397 = vmatprep.subr.bf16.mxu0 0
    %398 = vmatpush1.bf16.xpose.msra.mxu0 0
    %399 = vmatprep.subr.bf16.mxu0 0
    %400 = vmatpush1.bf16.xpose.msra.mxu0 0
    %401 = vmatprep.subr.bf16.mxu0 0
    %402 = vmatpush1.bf16.xpose.msra.mxu0 0
    %403 = vmatprep.subr.bf16.mxu0 0
    %404 = vmatpush1.bf16.xpose.msra.mxu0 0
    %405 = vmatprep.subr.bf16.mxu0 0
    %406 = vmatpush1.bf16.xpose.msra.mxu0 0
    %407 = vmatprep.subr.bf16.mxu0 0
    %408 = vmatpush1.bf16.xpose.msra.mxu0 0
    %409 = vmatprep.subr.bf16.mxu0 0
    %410 = vmatpush1.bf16.xpose.msra.mxu0 0
    %411 = vmatprep.mubr.bf16.mxu0 0
    %412 = vmatmul.mubr.bf16.gmra.mrb[0].mxu0 %v374
    %v413 = vpop.f32.mrb[0].mxu0
    %v414 = vadd.f32 0.0, %v413
    %v415 = vpop.f32.mrb[0].mxu0
    %v416 = vpop.f32.mrb[0].mxu0
    %v417 = vpop.f32.mrb[0].mxu0
    %418 = vdwg.mxu0
    %v419 = vmul.f32 %v414, 0.35355338
    %v420 = vadd.f32 %v419, %v26
    %v421 = vsel %vm140, %v420, -inf
    %422 = vmax.xlane.f32.xlu0 %v421
    %v423 = vpop.xlane.xlu0 %422
    %v424 = vsub.f32 %v420, %v423
    %v425 = vmul.f32 %v424, 1.442695
    %v426 = vpow.pop %v425
    %v427 = vsel %vm140, %v426, 0.0
    %428 = vadd.xlane.f32.xlu0 %v427
    %v429 = vpop.xlane.xlu0 %428
    %v430 = vrcp.pop %v429
    %v431 = vmul.f32 %v426, %v430
    %v432 = vpack.c.bf16 %v431, %v431
    %433 = vrot.lane.b32.xlu0 %v136, 48
    %v434 = vpop.permute.xlu0 %433
    %v436 = vsel %vm140, %v432, 0
    %v439 = vsel %vm206, %v434, 0
    %441 = vmatprep.subr.bf16.mxu0 0
    %442 = vmatpush1.bf16.msra.mxu0 %v439
    %443 = vmatprep.subr.bf16.mxu0 0
    %444 = vmatpush1.bf16.msra.mxu0 0
    %445 = vmatprep.subr.bf16.mxu0 0
    %446 = vmatpush1.bf16.msra.mxu0 0
    %447 = vmatprep.subr.bf16.mxu0 0
    %448 = vmatpush1.bf16.msra.mxu0 0
    %449 = vmatprep.subr.bf16.mxu0 0
    %450 = vmatpush1.bf16.msra.mxu0 0
    %451 = vmatprep.subr.bf16.mxu0 0
    %452 = vmatpush1.bf16.msra.mxu0 0
    %453 = vmatprep.subr.bf16.mxu0 0
    %454 = vmatpush1.bf16.msra.mxu0 0
    %455 = vmatprep.subr.bf16.mxu0 0
    %456 = vmatpush1.bf16.msra.mxu0 0
    %457 = vmatprep.subr.bf16.mxu0 0
    %458 = vmatpush1.bf16.msra.mxu0 0
    %459 = vmatprep.subr.bf16.mxu0 0
    %460 = vmatpush1.bf16.msra.mxu0 0
    %461 = vmatprep.subr.bf16.mxu0 0
    %462 = vmatpush1.bf16.msra.mxu0 0
    %463 = vmatprep.subr.bf16.mxu0 0
    %464 = vmatpush1.bf16.msra.mxu0 0
    %465 = vmatprep.subr.bf16.mxu0 0
    %466 = vmatpush1.bf16.msra.mxu0 0
    %467 = vmatprep.subr.bf16.mxu0 0
    %468 = vmatpush1.bf16.msra.mxu0 0
    %469 = vmatprep.subr.bf16.mxu0 0
    %470 = vmatpush1.bf16.msra.mxu0 0
    %471 = vmatprep.subr.bf16.mxu0 0
    %472 = vmatpush1.bf16.msra.mxu0 0
    %473 = vmatprep.mubr.bf16.mxu0 0
    %474 = vmatmul.mubr.bf16.gmra.mrb[0].mxu0 %v436
    %v475 = vpop.f32.mrb[0].mxu0
    %v476 = vadd.f32 0.0, %v475
    %v477 = vpop.f32.mrb[0].mxu0
    %v478 = vpop.f32.mrb[0].mxu0
    %v479 = vpop.f32.mrb[0].mxu0
    %480 = vdwg.mxu0
    %482 = vrot.lane.b32.xlu0 %v476, 16
    %v483 = vpop.permute.xlu0 %482
    %vm485 = vcmask 195712
    %486 = vst.msk [vmem:[#allocation2] sm:$0xff] %vm485, %v483
    %487 = vrot.lane.b32.xlu0 %v136, 104
    %v488 = vpop.permute.xlu0 %487
    %489 = vrot.lane.b32.xlu0 %v136, 72
    %v490 = vpop.permute.xlu0 %489
    %v492 = vsel %vm140, %v488, 0
    %v495 = vsel %vm140, %v490, 0
    %497 = vmatprep.subr.bf16.mxu0 0
    %498 = vmatpush1.bf16.xpose.msra.mxu0 %v495
    %499 = vmatprep.subr.bf16.mxu0 0
    %500 = vmatpush1.bf16.xpose.msra.mxu0 0
    %501 = vmatprep.subr.bf16.mxu0 0
    %502 = vmatpush1.bf16.xpose.msra.mxu0 0
    %503 = vmatprep.subr.bf16.mxu0 0
    %504 = vmatpush1.bf16.xpose.msra.mxu0 0
    %505 = vmatprep.subr.bf16.mxu0 0
    %506 = vmatpush1.bf16.xpose.msra.mxu0 0
    %507 = vmatprep.subr.bf16.mxu0 0
    %508 = vmatpush1.bf16.xpose.msra.mxu0 0
    %509 = vmatprep.subr.bf16.mxu0 0
    %510 = vmatpush1.bf16.xpose.msra.mxu0 0
    %511 = vmatprep.subr.bf16.mxu0 0
    %512 = vmatpush1.bf16.xpose.msra.mxu0 0
    %513 = vmatprep.subr.bf16.mxu0 0
    %514 = vmatpush1.bf16.xpose.msra.mxu0 0
    %515 = vmatprep.subr.bf16.mxu0 0
    %516 = vmatpush1.bf16.xpose.msra.mxu0 0
    %517 = vmatprep.subr.bf16.mxu0 0
    %518 = vmatpush1.bf16.xpose.msra.mxu0 0
    %519 = vmatprep.subr.bf16.mxu0 0
    %520 = vmatpush1.bf16.xpose.msra.mxu0 0
    %521 = vmatprep.subr.bf16.mxu0 0
    %522 = vmatpush1.bf16.xpose.msra.mxu0 0
    %523 = vmatprep.subr.bf16.mxu0 0
    %524 = vmatpush1.bf16.xpose.msra.mxu0 0
    %525 = vmatprep.subr.bf16.mxu0 0
    %526 = vmatpush1.bf16.xpose.msra.mxu0 0
    %527 = vmatprep.subr.bf16.mxu0 0
    %528 = vmatpush1.bf16.xpose.msra.mxu0 0
    %529 = vmatprep.mubr.bf16.mxu0 0
    %530 = vmatmul.mubr.bf16.gmra.mrb[0].mxu0 %v492
    %v531 = vpop.f32.mrb[0].mxu0
    %v532 = vadd.f32 0.0, %v531
    %v533 = vpop.f32.mrb[0].mxu0
    %v534 = vpop.f32.mrb[0].mxu0
    %v535 = vpop.f32.mrb[0].mxu0
    %536 = vdwg.mxu0
    %v537 = vmul.f32 %v532, 0.35355338
    %v538 = vadd.f32 %v537, %v26
    %v539 = vsel %vm140, %v538, -inf
    %540 = vmax.xlane.f32.xlu0 %v539
    %v541 = vpop.xlane.xlu0 %540
    %v542 = vsub.f32 %v538, %v541
    %v543 = vmul.f32 %v542, 1.442695
    %v544 = vpow.pop %v543
    %v545 = vsel %vm140, %v544, 0.0
    %546 = vadd.xlane.f32.xlu0 %v545
    %v547 = vpop.xlane.xlu0 %546
    %v548 = vrcp.pop %v547
    %v549 = vmul.f32 %v544, %v548
    %v550 = vpack.c.bf16 %v549, %v549
    %551 = vrot.lane.b32.xlu0 %v136, 40
    %v552 = vpop.permute.xlu0 %551
    %v554 = vsel %vm140, %v550, 0
    %v557 = vsel %vm206, %v552, 0
    %559 = vmatprep.subr.bf16.mxu0 0
    %560 = vmatpush1.bf16.msra.mxu0 %v557
    %561 = vmatprep.subr.bf16.mxu0 0
    %562 = vmatpush1.bf16.msra.mxu0 0
    %563 = vmatprep.subr.bf16.mxu0 0
    %564 = vmatpush1.bf16.msra.mxu0 0
    %565 = vmatprep.subr.bf16.mxu0 0
    %566 = vmatpush1.bf16.msra.mxu0 0
    %567 = vmatprep.subr.bf16.mxu0 0
    %568 = vmatpush1.bf16.msra.mxu0 0
    %569 = vmatprep.subr.bf16.mxu0 0
    %570 = vmatpush1.bf16.msra.mxu0 0
    %571 = vmatprep.subr.bf16.mxu0 0
    %572 = vmatpush1.bf16.msra.mxu0 0
    %573 = vmatprep.subr.bf16.mxu0 0
    %574 = vmatpush1.bf16.msra.mxu0 0
    %575 = vmatprep.subr.bf16.mxu0 0
    %576 = vmatpush1.bf16.msra.mxu0 0
    %577 = vmatprep.subr.bf16.mxu0 0
    %578 = vmatpush1.bf16.msra.mxu0 0
    %579 = vmatprep.subr.bf16.mxu0 0
    %580 = vmatpush1.bf16.msra.mxu0 0
    %581 = vmatprep.subr.bf16.mxu0 0
    %582 = vmatpush1.bf16.msra.mxu0 0
    %583 = vmatprep.subr.bf16.mxu0 0
    %584 = vmatpush1.bf16.msra.mxu0 0
    %585 = vmatprep.subr.bf16.mxu0 0
    %586 = vmatpush1.bf16.msra.mxu0 0
    %587 = vmatprep.subr.bf16.mxu0 0
    %588 = vmatpush1.bf16.msra.mxu0 0
    %589 = vmatprep.subr.bf16.mxu0 0
    %590 = vmatpush1.bf16.msra.mxu0 0
    %591 = vmatprep.mubr.bf16.mxu0 0
    %592 = vmatmul.mubr.bf16.gmra.mrb[0].mxu0 %v554
    %v593 = vpop.f32.mrb[0].mxu0
    %v594 = vadd.f32 0.0, %v593
    %v595 = vpop.f32.mrb[0].mxu0
    %v596 = vpop.f32.mrb[0].mxu0
    %v597 = vpop.f32.mrb[0].mxu0
    %598 = vdwg.mxu0
    %600 = vrot.lane.b32.xlu0 %v594, 24
    %v601 = vpop.permute.xlu0 %600
    %vm603 = vcmask 261312
    %604 = vst.msk [vmem:[#allocation2] sm:$0xff] %vm603, %v601
    %v605 = vpack.c.bf16 %v133, %v133
    %607 = vrot.lane.b32.xlu0 %v605, 96
    %v608 = vpop.permute.xlu0 %607
    %v610 = vsel %vm140, %v605, 0
    %v613 = vsel %vm140, %v608, 0
    %615 = vmatprep.subr.bf16.mxu0 0
    %616 = vmatpush1.bf16.xpose.msra.mxu0 %v613
    %617 = vmatprep.subr.bf16.mxu0 0
    %618 = vmatpush1.bf16.xpose.msra.mxu0 0
    %619 = vmatprep.subr.bf16.mxu0 0
    %620 = vmatpush1.bf16.xpose.msra.mxu0 0
    %621 = vmatprep.subr.bf16.mxu0 0
    %622 = vmatpush1.bf16.xpose.msra.mxu0 0
    %623 = vmatprep.subr.bf16.mxu0 0
    %624 = vmatpush1.bf16.xpose.msra.mxu0 0
    %625 = vmatprep.subr.bf16.mxu0 0
    %626 = vmatpush1.bf16.xpose.msra.mxu0 0
    %627 = vmatprep.subr.bf16.mxu0 0
    %628 = vmatpush1.bf16.xpose.msra.mxu0 0
    %629 = vmatprep.subr.bf16.mxu0 0
    %630 = vmatpush1.bf16.xpose.msra.mxu0 0
    %631 = vmatprep.subr.bf16.mxu0 0
    %632 = vmatpush1.bf16.xpose.msra.mxu0 0
    %633 = vmatprep.subr.bf16.mxu0 0
    %634 = vmatpush1.bf16.xpose.msra.mxu0 0
    %635 = vmatprep.subr.bf16.mxu0 0
    %636 = vmatpush1.bf16.xpose.msra.mxu0 0
    %637 = vmatprep.subr.bf16.mxu0 0
    %638 = vmatpush1.bf16.xpose.msra.mxu0 0
    %639 = vmatprep.subr.bf16.mxu0 0
    %640 = vmatpush1.bf16.xpose.msra.mxu0 0
    %641 = vmatprep.subr.bf16.mxu0 0
    %642 = vmatpush1.bf16.xpose.msra.mxu0 0
    %643 = vmatprep.subr.bf16.mxu0 0
    %644 = vmatpush1.bf16.xpose.msra.mxu0 0
    %645 = vmatprep.subr.bf16.mxu0 0
    %646 = vmatpush1.bf16.xpose.msra.mxu0 0
    %647 = vmatprep.mubr.bf16.mxu0 0
    %648 = vmatmul.mubr.bf16.gmra.mrb[0].mxu0 %v610
    %v649 = vpop.f32.mrb[0].mxu0
    %v650 = vadd.f32 0.0, %v649
    %v651 = vpop.f32.mrb[0].mxu0
    %v652 = vpop.f32.mrb[0].mxu0
    %v653 = vpop.f32.mrb[0].mxu0
    %654 = vdwg.mxu0
    %v655 = vmul.f32 %v650, 0.35355338
    %v656 = vadd.f32 %v655, %v27
    %v657 = vsel %vm140, %v656, -inf
    %658 = vmax.xlane.f32.xlu0 %v657
    %v659 = vpop.xlane.xlu0 %658
    %v660 = vsub.f32 %v656, %v659
    %v661 = vmul.f32 %v660, 1.442695
    %v662 = vpow.pop %v661
    %v663 = vsel %vm140, %v662, 0.0
    %664 = vadd.xlane.f32.xlu0 %v663
    %v665 = vpop.xlane.xlu0 %664
    %v666 = vrcp.pop %v665
    %v667 = vmul.f32 %v662, %v666
    %v668 = vpack.c.bf16 %v667, %v667
    %669 = vrot.lane.b32.xlu0 %v605, 64
    %v670 = vpop.permute.xlu0 %669
    %v672 = vsel %vm140, %v668, 0
    %v675 = vsel %vm206, %v670, 0
    %677 = vmatprep.subr.bf16.mxu0 0
    %678 = vmatpush1.bf16.msra.mxu0 %v675
    %679 = vmatprep.subr.bf16.mxu0 0
    %680 = vmatpush1.bf16.msra.mxu0 0
    %681 = vmatprep.subr.bf16.mxu0 0
    %682 = vmatpush1.bf16.msra.mxu0 0
    %683 = vmatprep.subr.bf16.mxu0 0
    %684 = vmatpush1.bf16.msra.mxu0 0
    %685 = vmatprep.subr.bf16.mxu0 0
    %686 = vmatpush1.bf16.msra.mxu0 0
    %687 = vmatprep.subr.bf16.mxu0 0
    %688 = vmatpush1.bf16.msra.mxu0 0
    %689 = vmatprep.subr.bf16.mxu0 0
    %690 = vmatpush1.bf16.msra.mxu0 0
    %691 = vmatprep.subr.bf16.mxu0 0
    %692 = vmatpush1.bf16.msra.mxu0 0
    %693 = vmatprep.subr.bf16.mxu0 0
    %694 = vmatpush1.bf16.msra.mxu0 0
    %695 = vmatprep.subr.bf16.mxu0 0
    %696 = vmatpush1.bf16.msra.mxu0 0
    %697 = vmatprep.subr.bf16.mxu0 0
    %698 = vmatpush1.bf16.msra.mxu0 0
    %699 = vmatprep.subr.bf16.mxu0 0
    %700 = vmatpush1.bf16.msra.mxu0 0
    %701 = vmatprep.subr.bf16.mxu0 0
    %702 = vmatpush1.bf16.msra.mxu0 0
    %703 = vmatprep.subr.bf16.mxu0 0
    %704 = vmatpush1.bf16.msra.mxu0 0
    %705 = vmatprep.subr.bf16.mxu0 0
    %706 = vmatpush1.bf16.msra.mxu0 0
    %707 = vmatprep.subr.bf16.mxu0 0
    %708 = vmatpush1.bf16.msra.mxu0 0
    %709 = vmatprep.mubr.bf16.mxu0 0
    %710 = vmatmul.mubr.bf16.gmra.mrb[0].mxu0 %v672
    %v711 = vpop.f32.mrb[0].mxu0
    %v712 = vadd.f32 0.0, %v711
    %v713 = vpop.f32.mrb[0].mxu0
    %v714 = vpop.f32.mrb[0].mxu0
    %v715 = vpop.f32.mrb[0].mxu0
    %716 = vdwg.mxu0
    %717 = vst.msk [vmem:[#allocation2 + $0x8] sm:$0xff] %vm140, %v712
    %718 = vrot.lane.b32.xlu0 %v605, 120
    %v719 = vpop.permute.xlu0 %718
    %720 = vrot.lane.b32.xlu0 %v605, 88
    %v721 = vpop.permute.xlu0 %720
    %v723 = vsel %vm140, %v719, 0
    %v726 = vsel %vm140, %v721, 0
    %728 = vmatprep.subr.bf16.mxu0 0
    %729 = vmatpush1.bf16.xpose.msra.mxu0 %v726
    %730 = vmatprep.subr.bf16.mxu0 0
    %731 = vmatpush1.bf16.xpose.msra.mxu0 0
    %732 = vmatprep.subr.bf16.mxu0 0
    %733 = vmatpush1.bf16.xpose.msra.mxu0 0
    %734 = vmatprep.subr.bf16.mxu0 0
    %735 = vmatpush1.bf16.xpose.msra.mxu0 0
    %736 = vmatprep.subr.bf16.mxu0 0
    %737 = vmatpush1.bf16.xpose.msra.mxu0 0
    %738 = vmatprep.subr.bf16.mxu0 0
    %739 = vmatpush1.bf16.xpose.msra.mxu0 0
    %740 = vmatprep.subr.bf16.mxu0 0
    %741 = vmatpush1.bf16.xpose.msra.mxu0 0
    %742 = vmatprep.subr.bf16.mxu0 0
    %743 = vmatpush1.bf16.xpose.msra.mxu0 0
    %744 = vmatprep.subr.bf16.mxu0 0
    %745 = vmatpush1.bf16.xpose.msra.mxu0 0
    %746 = vmatprep.subr.bf16.mxu0 0
    %747 = vmatpush1.bf16.xpose.msra.mxu0 0
    %748 = vmatprep.subr.bf16.mxu0 0
    %749 = vmatpush1.bf16.xpose.msra.mxu0 0
    %750 = vmatprep.subr.bf16.mxu0 0
    %751 = vmatpush1.bf16.xpose.msra.mxu0 0
    %752 = vmatprep.subr.bf16.mxu0 0
    %753 = vmatpush1.bf16.xpose.msra.mxu0 0
    %754 = vmatprep.subr.bf16.mxu0 0
    %755 = vmatpush1.bf16.xpose.msra.mxu0 0
    %756 = vmatprep.subr.bf16.mxu0 0
    %757 = vmatpush1.bf16.xpose.msra.mxu0 0
    %758 = vmatprep.subr.bf16.mxu0 0
    %759 = vmatpush1.bf16.xpose.msra.mxu0 0
    %760 = vmatprep.mubr.bf16.mxu0 0
    %761 = vmatmul.mubr.bf16.gmra.mrb[0].mxu0 %v723
    %v762 = vpop.f32.mrb[0].mxu0
    %v763 = vadd.f32 0.0, %v762
    %v764 = vpop.f32.mrb[0].mxu0
    %v765 = vpop.f32.mrb[0].mxu0
    %v766 = vpop.f32.mrb[0].mxu0
    %767 = vdwg.mxu0
    %v768 = vmul.f32 %v763, 0.35355338
    %v769 = vadd.f32 %v768, %v27
    %v770 = vsel %vm140, %v769, -inf
    %771 = vmax.xlane.f32.xlu0 %v770
    %v772 = vpop.xlane.xlu0 %771
    %v773 = vsub.f32 %v769, %v772
    %v774 = vmul.f32 %v773, 1.442695
    %v775 = vpow.pop %v774
    %v776 = vsel %vm140, %v775, 0.0
    %777 = vadd.xlane.f32.xlu0 %v776
    %v778 = vpop.xlane.xlu0 %777
    %v779 = vrcp.pop %v778
    %v780 = vmul.f32 %v775, %v779
    %v781 = vpack.c.bf16 %v780, %v780
    %782 = vrot.lane.b32.xlu0 %v605, 56
    %v783 = vpop.permute.xlu0 %782
    %v785 = vsel %vm140, %v781, 0
    %v788 = vsel %vm206, %v783, 0
    %790 = vmatprep.subr.bf16.mxu0 0
    %791 = vmatpush1.bf16.msra.mxu0 %v788
    %792 = vmatprep.subr.bf16.mxu0 0
    %793 = vmatpush1.bf16.msra.mxu0 0
    %794 = vmatprep.subr.bf16.mxu0 0
    %795 = vmatpush1.bf16.msra.mxu0 0
    %796 = vmatprep.subr.bf16.mxu0 0
    %797 = vmatpush1.bf16.msra.mxu0 0
    %798 = vmatprep.subr.bf16.mxu0 0
    %799 = vmatpush1.bf16.msra.mxu0 0
    %800 = vmatprep.subr.bf16.mxu0 0
    %801 = vmatpush1.bf16.msra.mxu0 0
    %802 = vmatprep.subr.bf16.mxu0 0
    %803 = vmatpush1.bf16.msra.mxu0 0
    %804 = vmatprep.subr.bf16.mxu0 0
    %805 = vmatpush1.bf16.msra.mxu0 0
    %806 = vmatprep.subr.bf16.mxu0 0
    %807 = vmatpush1.bf16.msra.mxu0 0
    %808 = vmatprep.subr.bf16.mxu0 0
    %809 = vmatpush1.bf16.msra.mxu0 0
    %810 = vmatprep.subr.bf16.mxu0 0
    %811 = vmatpush1.bf16.msra.mxu0 0
    %812 = vmatprep.subr.bf16.mxu0 0
    %813 = vmatpush1.bf16.msra.mxu0 0
    %814 = vmatprep.subr.bf16.mxu0 0
    %815 = vmatpush1.bf16.msra.mxu0 0
    %816 = vmatprep.subr.bf16.mxu0 0
    %817 = vmatpush1.bf16.msra.mxu0 0
    %818 = vmatprep.subr.bf16.mxu0 0
    %819 = vmatpush1.bf16.msra.mxu0 0
    %820 = vmatprep.subr.bf16.mxu0 0
    %821 = vmatpush1.bf16.msra.mxu0 0
    %822 = vmatprep.mubr.bf16.mxu0 0
    %823 = vmatmul.mubr.bf16.gmra.mrb[0].mxu0 %v785
    %v824 = vpop.f32.mrb[0].mxu0
    %v825 = vadd.f32 0.0, %v824
    %v826 = vpop.f32.mrb[0].mxu0
    %v827 = vpop.f32.mrb[0].mxu0
    %v828 = vpop.f32.mrb[0].mxu0
    %829 = vdwg.mxu0
    %831 = vrot.lane.b32.xlu0 %v825, 8
    %v832 = vpop.permute.xlu0 %831
    %834 = vst.msk [vmem:[#allocation2 + $0x8] sm:$0xff] %vm367, %v832
    %835 = vrot.lane.b32.xlu0 %v605, 112
    %v836 = vpop.permute.xlu0 %835
    %837 = vrot.lane.b32.xlu0 %v605, 80
    %v838 = vpop.permute.xlu0 %837
    %v840 = vsel %vm140, %v836, 0
    %v843 = vsel %vm140, %v838, 0
    %845 = vmatprep.subr.bf16.mxu0 0
    %846 = vmatpush1.bf16.xpose.msra.mxu0 %v843
    %847 = vmatprep.subr.bf16.mxu0 0
    %848 = vmatpush1.bf16.xpose.msra.mxu0 0
    %849 = vmatprep.subr.bf16.mxu0 0
    %850 = vmatpush1.bf16.xpose.msra.mxu0 0
    %851 = vmatprep.subr.bf16.mxu0 0
    %852 = vmatpush1.bf16.xpose.msra.mxu0 0
    %853 = vmatprep.subr.bf16.mxu0 0
    %854 = vmatpush1.bf16.xpose.msra.mxu0 0
    %855 = vmatprep.subr.bf16.mxu0 0
    %856 = vmatpush1.bf16.xpose.msra.mxu0 0
    %857 = vmatprep.subr.bf16.mxu0 0
    %858 = vmatpush1.bf16.xpose.msra.mxu0 0
    %859 = vmatprep.subr.bf16.mxu0 0
    %860 = vmatpush1.bf16.xpose.msra.mxu0 0
    %861 = vmatprep.subr.bf16.mxu0 0
    %862 = vmatpush1.bf16.xpose.msra.mxu0 0
    %863 = vmatprep.subr.bf16.mxu0 0
    %864 = vmatpush1.bf16.xpose.msra.mxu0 0
    %865 = vmatprep.subr.bf16.mxu0 0
    %866 = vmatpush1.bf16.xpose.msra.mxu0 0
    %867 = vmatprep.subr.bf16.mxu0 0
    %868 = vmatpush1.bf16.xpose.msra.mxu0 0
    %869 = vmatprep.subr.bf16.mxu0 0
    %870 = vmatpush1.bf16.xpose.msra.mxu0 0
    %871 = vmatprep.subr.bf16.mxu0 0
    %872 = vmatpush1.bf16.xpose.msra.mxu0 0
    %873 = vmatprep.subr.bf16.mxu0 0
    %874 = vmatpush1.bf16.xpose.msra.mxu0 0
    %875 = vmatprep.subr.bf16.mxu0 0
    %876 = vmatpush1.bf16.xpose.msra.mxu0 0
    %877 = vmatprep.mubr.bf16.mxu0 0
    %878 = vmatmul.mubr.bf16.gmra.mrb[0].mxu0 %v840
    %v879 = vpop.f32.mrb[0].mxu0
    %v880 = vadd.f32 0.0, %v879
    %v881 = vpop.f32.mrb[0].mxu0
    %v882 = vpop.f32.mrb[0].mxu0
    %v883 = vpop.f32.mrb[0].mxu0
    %884 = vdwg.mxu0
    %v885 = vmul.f32 %v880, 0.35355338
    %v886 = vadd.f32 %v885, %v27
    %v887 = vsel %vm140, %v886, -inf
    %888 = vmax.xlane.f32.xlu0 %v887
    %v889 = vpop.xlane.xlu0 %888
    %v890 = vsub.f32 %v886, %v889
    %v891 = vmul.f32 %v890, 1.442695
    %v892 = vpow.pop %v891
    %v893 = vsel %vm140, %v892, 0.0
    %894 = vadd.xlane.f32.xlu0 %v893
    %v895 = vpop.xlane.xlu0 %894
    %v896 = vrcp.pop %v895
    %v897 = vmul.f32 %v892, %v896
    %v898 = vpack.c.bf16 %v897, %v897
    %899 = vrot.lane.b32.xlu0 %v605, 48
    %v900 = vpop.permute.xlu0 %899
    %v902 = vsel %vm140, %v898, 0
    %v905 = vsel %vm206, %v900, 0
    %907 = vmatprep.subr.bf16.mxu0 0
    %908 = vmatpush1.bf16.msra.mxu0 %v905
    %909 = vmatprep.subr.bf16.mxu0 0
    %910 = vmatpush1.bf16.msra.mxu0 0
    %911 = vmatprep.subr.bf16.mxu0 0
    %912 = vmatpush1.bf16.msra.mxu0 0
    %913 = vmatprep.subr.bf16.mxu0 0
    %914 = vmatpush1.bf16.msra.mxu0 0
    %915 = vmatprep.subr.bf16.mxu0 0
    %916 = vmatpush1.bf16.msra.mxu0 0
    %917 = vmatprep.subr.bf16.mxu0 0
    %918 = vmatpush1.bf16.msra.mxu0 0
    %919 = vmatprep.subr.bf16.mxu0 0
    %920 = vmatpush1.bf16.msra.mxu0 0
    %921 = vmatprep.subr.bf16.mxu0 0
    %922 = vmatpush1.bf16.msra.mxu0 0
    %923 = vmatprep.subr.bf16.mxu0 0
    %924 = vmatpush1.bf16.msra.mxu0 0
    %925 = vmatprep.subr.bf16.mxu0 0
    %926 = vmatpush1.bf16.msra.mxu0 0
    %927 = vmatprep.subr.bf16.mxu0 0
    %928 = vmatpush1.bf16.msra.mxu0 0
    %929 = vmatprep.subr.bf16.mxu0 0
    %930 = vmatpush1.bf16.msra.mxu0 0
    %931 = vmatprep.subr.bf16.mxu0 0
    %932 = vmatpush1.bf16.msra.mxu0 0
    %933 = vmatprep.subr.bf16.mxu0 0
    %934 = vmatpush1.bf16.msra.mxu0 0
    %935 = vmatprep.subr.bf16.mxu0 0
    %936 = vmatpush1.bf16.msra.mxu0 0
    %937 = vmatprep.subr.bf16.mxu0 0
    %938 = vmatpush1.bf16.msra.mxu0 0
    %939 = vmatprep.mubr.bf16.mxu0 0
    %940 = vmatmul.mubr.bf16.gmra.mrb[0].mxu0 %v902
    %v941 = vpop.f32.mrb[0].mxu0
    %v942 = vadd.f32 0.0, %v941
    %v943 = vpop.f32.mrb[0].mxu0
    %v944 = vpop.f32.mrb[0].mxu0
    %v945 = vpop.f32.mrb[0].mxu0
    %946 = vdwg.mxu0
    %948 = vrot.lane.b32.xlu0 %v942, 16
    %v949 = vpop.permute.xlu0 %948
    %951 = vst.msk [vmem:[#allocation2 + $0x8] sm:$0xff] %vm485, %v949
    %952 = vrot.lane.b32.xlu0 %v605, 104
    %v953 = vpop.permute.xlu0 %952
    %954 = vrot.lane.b32.xlu0 %v605, 72
    %v955 = vpop.permute.xlu0 %954
    %v957 = vsel %vm140, %v953, 0
    %v960 = vsel %vm140, %v955, 0
    %962 = vmatprep.subr.bf16.mxu0 0
    %963 = vmatpush1.bf16.xpose.msra.mxu0 %v960
    %964 = vmatprep.subr.bf16.mxu0 0
    %965 = vmatpush1.bf16.xpose.msra.mxu0 0
    %966 = vmatprep.subr.bf16.mxu0 0
    %967 = vmatpush1.bf16.xpose.msra.mxu0 0
    %968 = vmatprep.subr.bf16.mxu0 0
    %969 = vmatpush1.bf16.xpose.msra.mxu0 0
    %970 = vmatprep.subr.bf16.mxu0 0
    %971 = vmatpush1.bf16.xpose.msra.mxu0 0
    %972 = vmatprep.subr.bf16.mxu0 0
    %973 = vmatpush1.bf16.xpose.msra.mxu0 0
    %974 = vmatprep.subr.bf16.mxu0 0
    %975 = vmatpush1.bf16.xpose.msra.mxu0 0
    %976 = vmatprep.subr.bf16.mxu0 0
    %977 = vmatpush1.bf16.xpose.msra.mxu0 0
    %978 = vmatprep.subr.bf16.mxu0 0
    %979 = vmatpush1.bf16.xpose.msra.mxu0 0
    %980 = vmatprep.subr.bf16.mxu0 0
    %981 = vmatpush1.bf16.xpose.msra.mxu0 0
    %982 = vmatprep.subr.bf16.mxu0 0
    %983 = vmatpush1.bf16.xpose.msra.mxu0 0
    %984 = vmatprep.subr.bf16.mxu0 0
    %985 = vmatpush1.bf16.xpose.msra.mxu0 0
    %986 = vmatprep.subr.bf16.mxu0 0
    %987 = vmatpush1.bf16.xpose.msra.mxu0 0
    %988 = vmatprep.subr.bf16.mxu0 0
    %989 = vmatpush1.bf16.xpose.msra.mxu0 0
    %990 = vmatprep.subr.bf16.mxu0 0
    %991 = vmatpush1.bf16.xpose.msra.mxu0 0
    %992 = vmatprep.subr.bf16.mxu0 0
    %993 = vmatpush1.bf16.xpose.msra.mxu0 0
    %994 = vmatprep.mubr.bf16.mxu0 0
    %995 = vmatmul.mubr.bf16.gmra.mrb[0].mxu0 %v957
    %v996 = vpop.f32.mrb[0].mxu0
    %v997 = vadd.f32 0.0, %v996
    %v998 = vpop.f32.mrb[0].mxu0
    %v999 = vpop.f32.mrb[0].mxu0
    %v1000 = vpop.f32.mrb[0].mxu0
    %1001 = vdwg.mxu0
    %v1002 = vmul.f32 %v997, 0.35355338
    %v1003 = vadd.f32 %v1002, %v27
    %v1004 = vsel %vm140, %v1003, -inf
    %1005 = vmax.xlane.f32.xlu0 %v1004
    %v1006 = vpop.xlane.xlu0 %1005
    %v1007 = vsub.f32 %v1003, %v1006
    %v1008 = vmul.f32 %v1007, 1.442695
    %v1009 = vpow.pop %v1008
    %v1010 = vsel %vm140, %v1009, 0.0
    %1011 = vadd.xlane.f32.xlu0 %v1010
    %v1012 = vpop.xlane.xlu0 %1011
    %v1013 = vrcp.pop %v1012
    %v1014 = vmul.f32 %v1009, %v1013
    %v1015 = vpack.c.bf16 %v1014, %v1014
    %1016 = vrot.lane.b32.xlu0 %v605, 40
    %v1017 = vpop.permute.xlu0 %1016
    %v1019 = vsel %vm140, %v1015, 0
    %v1022 = vsel %vm206, %v1017, 0
    %1024 = vmatprep.subr.bf16.mxu0 0
    %1025 = vmatpush1.bf16.msra.mxu0 %v1022
    %1026 = vmatprep.subr.bf16.mxu0 0
    %1027 = vmatpush1.bf16.msra.mxu0 0
    %1028 = vmatprep.subr.bf16.mxu0 0
    %1029 = vmatpush1.bf16.msra.mxu0 0
    %1030 = vmatprep.subr.bf16.mxu0 0
    %1031 = vmatpush1.bf16.msra.mxu0 0
    %1032 = vmatprep.subr.bf16.mxu0 0
    %1033 = vmatpush1.bf16.msra.mxu0 0
    %1034 = vmatprep.subr.bf16.mxu0 0
    %1035 = vmatpush1.bf16.msra.mxu0 0
    %1036 = vmatprep.subr.bf16.mxu0 0
    %1037 = vmatpush1.bf16.msra.mxu0 0
    %1038 = vmatprep.subr.bf16.mxu0 0
    %1039 = vmatpush1.bf16.msra.mxu0 0
    %1040 = vmatprep.subr.bf16.mxu0 0
    %1041 = vmatpush1.bf16.msra.mxu0 0
    %1042 = vmatprep.subr.bf16.mxu0 0
    %1043 = vmatpush1.bf16.msra.mxu0 0
    %1044 = vmatprep.subr.bf16.mxu0 0
    %1045 = vmatpush1.bf16.msra.mxu0 0
    %1046 = vmatprep.subr.bf16.mxu0 0
    %1047 = vmatpush1.bf16.msra.mxu0 0
    %1048 = vmatprep.subr.bf16.mxu0 0
    %1049 = vmatpush1.bf16.msra.mxu0 0
    %1050 = vmatprep.subr.bf16.mxu0 0
    %1051 = vmatpush1.bf16.msra.mxu0 0
    %1052 = vmatprep.subr.bf16.mxu0 0
    %1053 = vmatpush1.bf16.msra.mxu0 0
    %1054 = vmatprep.subr.bf16.mxu0 0
    %1055 = vmatpush1.bf16.msra.mxu0 0
    %1056 = vmatprep.mubr.bf16.mxu0 0
    %1057 = vmatmul.mubr.bf16.gmra.mrb[0].mxu0 %v1019
    %v1058 = vpop.f32.mrb[0].mxu0
    %v1059 = vadd.f32 0.0, %v1058
    %v1060 = vpop.f32.mrb[0].mxu0
    %v1061 = vpop.f32.mrb[0].mxu0
    %v1062 = vpop.f32.mrb[0].mxu0
    %1063 = vdwg.mxu0
    %1065 = vrot.lane.b32.xlu0 %v1059, 24
    %v1066 = vpop.permute.xlu0 %1065
    %1068 = vst.msk [vmem:[#allocation2 + $0x8] sm:$0xff] %vm603, %v1066
    %v1069 = vld [vmem:[#allocation2] sm:$0xff]
    %v1070 = vld [vmem:[#allocation2 + $0x8] sm:$0xff]
    %v1071 = vpack.c.bf16 %v1070, %v1069
    %v1072 = vlaneseq
    %v1073 = vshrl.u32 %v1072, 7
    %v1074 = vsub.s32 1, %v1073
    %v1075 = vrot.slane %v72, %v1074
    %v1080 = vunpack.c.l.b16 %v32
    %v1081 = vunpack.c.l.b16 %v33
    %v1082 = vunpack.c.l.b16 %v34
    %v1083 = vunpack.c.l.b16 %v35
    %v1084 = vpack.c.b16 %v1081, %v1080
    %v1085 = vpack.c.b16 %v1083, %v1082
    %v1089 = vsel %vm91, %v1071, 0
    %1091 = vmatprep.subr.bf16.mxu0 0
    %1092 = vmatpush1.bf16.msra.mxu0 %v1084
    %1093 = vmatprep.subr.bf16.mxu0 0
    %1094 = vmatpush1.bf16.msra.mxu0 %v1085
    %1095 = vmatprep.subr.bf16.mxu0 0
    %1096 = vmatpush1.bf16.msra.mxu0 0
    %1097 = vmatprep.subr.bf16.mxu0 0
    %1098 = vmatpush1.bf16.msra.mxu0 0
    %1099 = vmatprep.subr.bf16.mxu0 0
    %1100 = vmatpush1.bf16.msra.mxu0 0
    %1101 = vmatprep.subr.bf16.mxu0 0
    %1102 = vmatpush1.bf16.msra.mxu0 0
    %1103 = vmatprep.subr.bf16.mxu0 0
    %1104 = vmatpush1.bf16.msra.mxu0 0
    %1105 = vmatprep.subr.bf16.mxu0 0
    %1106 = vmatpush1.bf16.msra.mxu0 0
    %1107 = vmatprep.subr.bf16.mxu0 0
    %1108 = vmatpush1.bf16.msra.mxu0 0
    %1109 = vmatprep.subr.bf16.mxu0 0
    %1110 = vmatpush1.bf16.msra.mxu0 0
    %1111 = vmatprep.subr.bf16.mxu0 0
    %1112 = vmatpush1.bf16.msra.mxu0 0
    %1113 = vmatprep.subr.bf16.mxu0 0
    %1114 = vmatpush1.bf16.msra.mxu0 0
    %1115 = vmatprep.subr.bf16.mxu0 0
    %1116 = vmatpush1.bf16.msra.mxu0 0
    %1117 = vmatprep.subr.bf16.mxu0 0
    %1118 = vmatpush1.bf16.msra.mxu0 0
    %1119 = vmatprep.subr.bf16.mxu0 0
    %1120 = vmatpush1.bf16.msra.mxu0 0
    %1121 = vmatprep.subr.bf16.mxu0 0
    %1122 = vmatpush1.bf16.msra.mxu0 0
    %1123 = vmatprep.mubr.bf16.mxu0 0
    %1124 = vmatmul.mubr.bf16.gmra.mrb[0].mxu0 %v1089
    %v1125 = vpop.f32.mrb[0].mxu0
    %v1126 = vadd.f32 %v1075, %v1125
    %v1127 = vpop.f32.mrb[0].mxu0
    %v1128 = vpop.f32.mrb[0].mxu0
    %v1129 = vadd.f32 %v1075, %v1128
    %v1130 = vpop.f32.mrb[0].mxu0
    %1131 = vdwg.mxu0
    %v1132 = vadd.f32 %v22, %v1126
    %v1133 = vadd.f32 %v23, %v1129
    %v1134 = vsel %vm91, %v1132, 0.0
    %1135 = vadd.xlane.f32.xlu0 %v1134
    %v1136 = vpop.xlane.xlu0 %1135
    %v1137 = vsel %vm91, %v1133, 0.0
    %1138 = vadd.xlane.f32.xlu0 %v1137
    %v1139 = vpop.xlane.xlu0 %1138
    %v1140 = vrcp.pop 32.0
    %v1141 = vmul.f32 %v1136, %v1140
    %v1142 = vmul.f32 %v1139, %v1140
    %v1143 = vsub.f32 %v1132, %v1141
    %v1144 = vsub.f32 %v1133, %v1142
    %v1145 = vmul.f32 %v1143, %v1143
    %v1146 = vmul.f32 %v1144, %v1144
    %v1147 = vsel %vm91, %v1145, 0.0
    %1148 = vadd.xlane.f32.xlu0 %v1147
    %v1149 = vpop.xlane.xlu0 %1148
    %v1150 = vsel %vm91, %v1146, 0.0
    %1151 = vadd.xlane.f32.xlu0 %v1150
    %v1152 = vpop.xlane.xlu0 %1151
    %v1153 = vmul.f32 %v1149, %v1140
    %v1154 = vmul.f32 %v1152, %v1140
    %v1155 = vadd.f32 %v1153, 1e-05
    %v1156 = vadd.f32 %v1154, 1e-05
    %v1157 = vrsqrt.pop %v1155
    %v1158 = vrsqrt.pop %v1156
    %v1159 = vmul.f32 %v1143, %v1157
    %v1160 = vmul.f32 %v1144, %v1158
    %v1161 = vlaneseq
    %v1162 = vshrl.u32 %v1161, 7
    %v1163 = vsub.s32 4, %v1162
    %v1164 = vrot.slane %v72, %v1163
    %v1165 = vmul.f32 %v1159, %v1164
    %v1166 = vmul.f32 %v1160, %v1164
    %v1167 = vlaneseq
    %v1168 = vshrl.u32 %v1167, 7
    %v1169 = vsub.s32 5, %v1168
    %v1170 = vrot.slane %v72, %v1169
    %v1171 = vadd.f32 %v1165, %v1170
    %v1172 = vadd.f32 %v1166, %v1170
    %v1173 = vpack.c.bf16 %v1172, %v1171
    %v1174 = vlaneseq
    %v1175 = vshrl.u32 %v1174, 7
    %v1176 = vsub.s32 2, %v1175
    %v1177 = vrot.slane %v72, %v1176
    %v1182 = vunpack.c.l.b16 %v36
    %v1183 = vunpack.c.l.b16 %v37
    %v1184 = vunpack.c.l.b16 %v38
    %v1185 = vunpack.c.l.b16 %v39
    %v1186 = vpack.c.b16 %v1183, %v1182
    %v1187 = vpack.c.b16 %v1185, %v1184
    %v1191 = vsel %vm91, %v1173, 0
    %1193 = vmatprep.subr.bf16.mxu0 0
    %1194 = vmatpush1.bf16.msra.mxu0 %v1186
    %1195 = vmatprep.subr.bf16.mxu0 0
    %1196 = vmatpush1.bf16.msra.mxu0 %v1187
    %1197 = vmatprep.subr.bf16.mxu0 0
    %1198 = vmatpush1.bf16.msra.mxu0 0
    %1199 = vmatprep.subr.bf16.mxu0 0
    %1200 = vmatpush1.bf16.msra.mxu0 0
    %1201 = vmatprep.subr.bf16.mxu0 0
    %1202 = vmatpush1.bf16.msra.mxu0 0
    %1203 = vmatprep.subr.bf16.mxu0 0
    %1204 = vmatpush1.bf16.msra.mxu0 0
    %1205 = vmatprep.subr.bf16.mxu0 0
    %1206 = vmatpush1.bf16.msra.mxu0 0
    %1207 = vmatprep.subr.bf16.mxu0 0
    %1208 = vmatpush1.bf16.msra.mxu0 0
    %1209 = vmatprep.subr.bf16.mxu0 0
    %1210 = vmatpush1.bf16.msra.mxu0 0
    %1211 = vmatprep.subr.bf16.mxu0 0
    %1212 = vmatpush1.bf16.msra.mxu0 0
    %1213 = vmatprep.subr.bf16.mxu0 0
    %1214 = vmatpush1.bf16.msra.mxu0 0
    %1215 = vmatprep.subr.bf16.mxu0 0
    %1216 = vmatpush1.bf16.msra.mxu0 0
    %1217 = vmatprep.subr.bf16.mxu0 0
    %1218 = vmatpush1.bf16.msra.mxu0 0
    %1219 = vmatprep.subr.bf16.mxu0 0
    %1220 = vmatpush1.bf16.msra.mxu0 0
    %1221 = vmatprep.subr.bf16.mxu0 0
    %1222 = vmatpush1.bf16.msra.mxu0 0
    %1223 = vmatprep.subr.bf16.mxu0 0
    %1224 = vmatpush1.bf16.msra.mxu0 0
    %1225 = vmatprep.mubr.bf16.mxu0 0
    %1226 = vmatmul.mubr.bf16.gmra.mrb[0].mxu0 %v1191
    %v1227 = vpop.f32.mrb[0].mxu0
    %v1228 = vadd.f32 %v1177, %v1227
    %v1229 = vpop.f32.mrb[0].mxu0
    %v1230 = vpop.f32.mrb[0].mxu0
    %v1231 = vadd.f32 %v1177, %v1230
    %v1232 = vpop.f32.mrb[0].mxu0
    %1233 = vdwg.mxu0
    %v1234 = vmax.f32 %v1228, 0.0
    %v1235 = vmax.f32 %v1231, 0.0
    %v1236 = vpack.c.bf16 %v1235, %v1234
    %v1237 = vlaneseq
    %v1238 = vshrl.u32 %v1237, 7
    %v1239 = vsub.s32 3, %v1238
    %v1240 = vrot.slane %v72, %v1239
    %v1249 = vunpack.c.l.b16 %v40
    %v1250 = vunpack.c.l.b16 %v41
    %v1251 = vunpack.c.l.b16 %v42
    %v1252 = vunpack.c.l.b16 %v43
    %v1253 = vunpack.c.l.b16 %v44
    %v1254 = vunpack.c.l.b16 %v45
    %v1255 = vunpack.c.l.b16 %v46
    %v1256 = vunpack.c.l.b16 %v47
    %v1257 = vpack.c.b16 %v1250, %v1249
    %v1258 = vpack.c.b16 %v1252, %v1251
    %v1259 = vpack.c.b16 %v1254, %v1253
    %v1260 = vpack.c.b16 %v1256, %v1255
    %vm1265 = vcmask 523264
    %v1267 = vsel %vm1265, %v1236, 0
    %1269 = vmatprep.subr.bf16.mxu0 0
    %1270 = vmatpush1.bf16.msra.mxu0 %v1257
    %1271 = vmatprep.subr.bf16.mxu0 0
    %1272 = vmatpush1.bf16.msra.mxu0 %v1258
    %1273 = vmatprep.subr.bf16.mxu0 0
    %1274 = vmatpush1.bf16.msra.mxu0 %v1259
    %1275 = vmatprep.subr.bf16.mxu0 0
    %1276 = vmatpush1.bf16.msra.mxu0 %v1260
    %1277 = vmatprep.subr.bf16.mxu0 0
    %1278 = vmatpush1.bf16.msra.mxu0 0
    %1279 = vmatprep.subr.bf16.mxu0 0
    %1280 = vmatpush1.bf16.msra.mxu0 0
    %1281 = vmatprep.subr.bf16.mxu0 0
    %1282 = vmatpush1.bf16.msra.mxu0 0
    %1283 = vmatprep.subr.bf16.mxu0 0
    %1284 = vmatpush1.bf16.msra.mxu0 0
    %1285 = vmatprep.subr.bf16.mxu0 0
    %1286 = vmatpush1.bf16.msra.mxu0 0
    %1287 = vmatprep.subr.bf16.mxu0 0
    %1288 = vmatpush1.bf16.msra.mxu0 0
    %1289 = vmatprep.subr.bf16.mxu0 0
    %1290 = vmatpush1.bf16.msra.mxu0 0
    %1291 = vmatprep.subr.bf16.mxu0 0
    %1292 = vmatpush1.bf16.msra.mxu0 0
    %1293 = vmatprep.subr.bf16.mxu0 0
    %1294 = vmatpush1.bf16.msra.mxu0 0
    %1295 = vmatprep.subr.bf16.mxu0 0
    %1296 = vmatpush1.bf16.msra.mxu0 0
    %1297 = vmatprep.subr.bf16.mxu0 0
    %1298 = vmatpush1.bf16.msra.mxu0 0
    %1299 = vmatprep.subr.bf16.mxu0 0
    %1300 = vmatpush1.bf16.msra.mxu0 0
    %1301 = vmatprep.mubr.bf16.mxu0 0
    %1302 = vmatmul.mubr.bf16.gmra.mrb[0].mxu0 %v1267
    %v1303 = vpop.f32.mrb[0].mxu0
    %v1304 = vadd.f32 %v1240, %v1303
    %v1305 = vpop.f32.mrb[0].mxu0
    %v1306 = vpop.f32.mrb[0].mxu0
    %v1307 = vadd.f32 %v1240, %v1306
    %v1308 = vpop.f32.mrb[0].mxu0
    %1309 = vdwg.mxu0
    %v1310 = vadd.f32 %v1171, %v1304
    %v1311 = vadd.f32 %v1172, %v1307
    %v1312 = vsel %vm91, %v1310, 0.0
    %1313 = vadd.xlane.f32.xlu0 %v1312
    %v1314 = vpop.xlane.xlu0 %1313
    %v1315 = vsel %vm91, %v1311, 0.0
    %1316 = vadd.xlane.f32.xlu0 %v1315
    %v1317 = vpop.xlane.xlu0 %1316
    %v1318 = vmul.f32 %v1314, %v1140
    %v1319 = vmul.f32 %v1317, %v1140
    %v1320 = vsub.f32 %v1310, %v1318
    %v1321 = vsub.f32 %v1311, %v1319
    %v1322 = vmul.f32 %v1320, %v1320
    %v1323 = vmul.f32 %v1321, %v1321
    %v1324 = vsel %vm91, %v1322, 0.0
    %1325 = vadd.xlane.f32.xlu0 %v1324
    %v1326 = vpop.xlane.xlu0 %1325
    %v1327 = vsel %vm91, %v1323, 0.0
    %1328 = vadd.xlane.f32.xlu0 %v1327
    %v1329 = vpop.xlane.xlu0 %1328
    %v1330 = vmul.f32 %v1326, %v1140
    %v1331 = vmul.f32 %v1329, %v1140
    %v1332 = vadd.f32 %v1330, 1e-05
    %v1333 = vadd.f32 %v1331, 1e-05
    %v1334 = vrsqrt.pop %v1332
    %v1335 = vrsqrt.pop %v1333
    %v1336 = vmul.f32 %v1320, %v1334
    %v1337 = vmul.f32 %v1321, %v1335
    %v1338 = vlaneseq
    %v1339 = vshrl.u32 %v1338, 7
    %v1340 = vsub.s32 6, %v1339
    %v1341 = vrot.slane %v72, %v1340
    %v1342 = vmul.f32 %v1336, %v1341
    %v1343 = vmul.f32 %v1337, %v1341
    %v1344 = vlaneseq
    %v1345 = vshrl.u32 %v1344, 7
    %v1346 = vsub.s32 7, %v1345
    %v1347 = vrot.slane %v72, %v1346
    %v1348 = vadd.f32 %v1342, %v1347
    %v1349 = vadd.f32 %v1343, %v1347
    %v1350 = vmul.f32 %v1348, %v24
    %v1351 = vmul.f32 %v1349, %v25
    %v1352 = vpack.c.bf16 %v1351, %v1350
    %v1353 = vlaneseq
    %v1354 = vshrl.u32 %v1353, 7
    %v1355 = vsub.s32 0, %v1354
    %v1356 = vrot.slane %v73, %v1355
    %v1361 = vunpack.c.l.b16 %v48
    %v1362 = vunpack.c.l.b16 %v49
    %v1363 = vunpack.c.l.b16 %v50
    %v1364 = vunpack.c.l.b16 %v51
    %v1365 = vpack.c.b16 %v1362, %v1361
    %v1366 = vpack.c.b16 %v1364, %v1363
    %v1370 = vsel %vm91, %v1352, 0
    %1372 = vmatprep.subr.bf16.mxu0 0
    %1373 = vmatpush1.bf16.msra.mxu0 %v1365
    %1374 = vmatprep.subr.bf16.mxu0 0
    %1375 = vmatpush1.bf16.msra.mxu0 %v1366
    %1376 = vmatprep.subr.bf16.mxu0 0
    %1377 = vmatpush1.bf16.msra.mxu0 0
    %1378 = vmatprep.subr.bf16.mxu0 0
    %1379 = vmatpush1.bf16.msra.mxu0 0
    %1380 = vmatprep.subr.bf16.mxu0 0
    %1381 = vmatpush1.bf16.msra.mxu0 0
    %1382 = vmatprep.subr.bf16.mxu0 0
    %1383 = vmatpush1.bf16.msra.mxu0 0
    %1384 = vmatprep.subr.bf16.mxu0 0
    %1385 = vmatpush1.bf16.msra.mxu0 0
    %1386 = vmatprep.subr.bf16.mxu0 0
    %1387 = vmatpush1.bf16.msra.mxu0 0
    %1388 = vmatprep.subr.bf16.mxu0 0
    %1389 = vmatpush1.bf16.msra.mxu0 0
    %1390 = vmatprep.subr.bf16.mxu0 0
    %1391 = vmatpush1.bf16.msra.mxu0 0
    %1392 = vmatprep.subr.bf16.mxu0 0
    %1393 = vmatpush1.bf16.msra.mxu0 0
    %1394 = vmatprep.subr.bf16.mxu0 0
    %1395 = vmatpush1.bf16.msra.mxu0 0
    %1396 = vmatprep.subr.bf16.mxu0 0
    %1397 = vmatpush1.bf16.msra.mxu0 0
    %1398 = vmatprep.subr.bf16.mxu0 0
    %1399 = vmatpush1.bf16.msra.mxu0 0
    %1400 = vmatprep.subr.bf16.mxu0 0
    %1401 = vmatpush1.bf16.msra.mxu0 0
    %1402 = vmatprep.subr.bf16.mxu0 0
    %1403 = vmatpush1.bf16.msra.mxu0 0
    %1404 = vmatprep.mubr.bf16.mxu0 0
    %1405 = vmatmul.mubr.bf16.gmra.mrb[0].mxu0 %v1370
    %v1406 = vpop.f32.mrb[0].mxu0
    %v1407 = vadd.f32 %v1356, %v1406
    %v1408 = vpop.f32.mrb[0].mxu0
    %v1409 = vpop.f32.mrb[0].mxu0
    %v1410 = vadd.f32 %v1356, %v1409
    %v1411 = vpop.f32.mrb[0].mxu0
    %1412 = vdwg.mxu0
    %v1413 = vmax.f32 %v1407, 0.0
    %v1414 = vmax.f32 %v1410, 0.0
    %v1415 = vpack.c.bf16 %v1414, %v1413
    %v1416 = vlaneseq
    %v1417 = vshrl.u32 %v1416, 7
    %v1418 = vsub.s32 1, %v1417
    %v1419 = vrot.slane %v73, %v1418
    %v1428 = vunpack.c.l.b16 %v52
    %v1429 = vunpack.c.l.b16 %v53
    %v1430 = vunpack.c.l.b16 %v54
    %v1431 = vunpack.c.l.b16 %v55
    %v1432 = vunpack.c.l.b16 %v56
    %v1433 = vunpack.c.l.b16 %v57
    %v1434 = vunpack.c.l.b16 %v58
    %v1435 = vunpack.c.l.b16 %v59
    %v1436 = vpack.c.b16 %v1429, %v1428
    %v1437 = vpack.c.b16 %v1431, %v1430
    %v1438 = vpack.c.b16 %v1433, %v1432
    %v1439 = vpack.c.b16 %v1435, %v1434
    %v1445 = vsel %vm1265, %v1415, 0
    %1447 = vmatprep.subr.bf16.mxu0 0
    %1448 = vmatpush1.bf16.msra.mxu0 %v1436
    %1449 = vmatprep.subr.bf16.mxu0 0
    %1450 = vmatpush1.bf16.msra.mxu0 %v1437
    %1451 = vmatprep.subr.bf16.mxu0 0
    %1452 = vmatpush1.bf16.msra.mxu0 %v1438
    %1453 = vmatprep.subr.bf16.mxu0 0
    %1454 = vmatpush1.bf16.msra.mxu0 %v1439
    %1455 = vmatprep.subr.bf16.mxu0 0
    %1456 = vmatpush1.bf16.msra.mxu0 0
    %1457 = vmatprep.subr.bf16.mxu0 0
    %1458 = vmatpush1.bf16.msra.mxu0 0
    %1459 = vmatprep.subr.bf16.mxu0 0
    %1460 = vmatpush1.bf16.msra.mxu0 0
    %1461 = vmatprep.subr.bf16.mxu0 0
    %1462 = vmatpush1.bf16.msra.mxu0 0
    %1463 = vmatprep.subr.bf16.mxu0 0
    %1464 = vmatpush1.bf16.msra.mxu0 0
    %1465 = vmatprep.subr.bf16.mxu0 0
    %1466 = vmatpush1.bf16.msra.mxu0 0
    %1467 = vmatprep.subr.bf16.mxu0 0
    %1468 = vmatpush1.bf16.msra.mxu0 0
    %1469 = vmatprep.subr.bf16.mxu0 0
    %1470 = vmatpush1.bf16.msra.mxu0 0
    %1471 = vmatprep.subr.bf16.mxu0 0
    %1472 = vmatpush1.bf16.msra.mxu0 0
    %1473 = vmatprep.subr.bf16.mxu0 0
    %1474 = vmatpush1.bf16.msra.mxu0 0
    %1475 = vmatprep.subr.bf16.mxu0 0
    %1476 = vmatpush1.bf16.msra.mxu0 0
    %1477 = vmatprep.subr.bf16.mxu0 0
    %1478 = vmatpush1.bf16.msra.mxu0 0
    %1479 = vmatprep.mubr.bf16.mxu0 0
    %1480 = vmatmul.mubr.bf16.gmra.mrb[0].mxu0 %v1445
    %v1481 = vpop.f32.mrb[0].mxu0
    %v1482 = vadd.f32 %v1419, %v1481
    %v1483 = vpop.f32.mrb[0].mxu0
    %v1484 = vpop.f32.mrb[0].mxu0
    %v1485 = vadd.f32 %v1419, %v1484
    %v1486 = vpop.f32.mrb[0].mxu0
    %1487 = vdwg.mxu0
    %v1488 = vpack.c.bf16 %v1482, %v1482
    %v1490 = vsel %vm91, %v1488, 0
    %1492 = vmatprep.subr.bf16.mxu0 0
    %1493 = vmatpush1.bf16.xpose.msra.mxu0 %v1490
    %1494 = vmatprep.subr.bf16.mxu0 0
    %1495 = vmatpush1.bf16.xpose.msra.mxu0 0
    %1496 = vmatprep.subr.bf16.mxu0 0
    %1497 = vmatpush1.bf16.xpose.msra.mxu0 0
    %1498 = vmatprep.subr.bf16.mxu0 0
    %1499 = vmatpush1.bf16.xpose.msra.mxu0 0
    %1500 = vmatprep.subr.bf16.mxu0 0
    %1501 = vmatpush1.bf16.xpose.msra.mxu0 0
    %1502 = vmatprep.subr.bf16.mxu0 0
    %1503 = vmatpush1.bf16.xpose.msra.mxu0 0
    %1504 = vmatprep.subr.bf16.mxu0 0
    %1505 = vmatpush1.bf16.xpose.msra.mxu0 0
    %1506 = vmatprep.subr.bf16.mxu0 0
    %1507 = vmatpush1.bf16.xpose.msra.mxu0 0
    %1508 = vmatprep.subr.bf16.mxu0 0
    %1509 = vmatpush1.bf16.xpose.msra.mxu0 0
    %1510 = vmatprep.subr.bf16.mxu0 0
    %1511 = vmatpush1.bf16.xpose.msra.mxu0 0
    %1512 = vmatprep.subr.bf16.mxu0 0
    %1513 = vmatpush1.bf16.xpose.msra.mxu0 0
    %1514 = vmatprep.subr.bf16.mxu0 0
    %1515 = vmatpush1.bf16.xpose.msra.mxu0 0
    %1516 = vmatprep.subr.bf16.mxu0 0
    %1517 = vmatpush1.bf16.xpose.msra.mxu0 0
    %1518 = vmatprep.subr.bf16.mxu0 0
    %1519 = vmatpush1.bf16.xpose.msra.mxu0 0
    %1520 = vmatprep.subr.bf16.mxu0 0
    %1521 = vmatpush1.bf16.xpose.msra.mxu0 0
    %1522 = vmatprep.subr.bf16.mxu0 0
    %1523 = vmatpush1.bf16.xpose.msra.mxu0 0
    %1524 = vmatprep.mubr.bf16.mxu0 0
    %1525 = vmatmul.mubr.bf16.gmra.mrb[0].mxu0 %v1490
    %v1526 = vpop.f32.mrb[0].mxu0
    %v1527 = vadd.f32 0.0, %v1526
    %v1528 = vpop.f32.mrb[0].mxu0
    %v1529 = vpop.f32.mrb[0].mxu0
    %v1530 = vpop.f32.mrb[0].mxu0
    %1531 = vdwg.mxu0
    %v1532 = vmul.f32 %v1527, 0.17677669
    %v1533 = vadd.f32 %v1532, %v26
    %v1534 = vsel %vm140, %v1533, -inf
    %1535 = vmax.xlane.f32.xlu0 %v1534
    %v1536 = vpop.xlane.xlu0 %1535
    %v1537 = vsub.f32 %v1533, %v1536
    %v1538 = vmul.f32 %v1537, 1.442695
    %v1539 = vpow.pop %v1538
    %v1540 = vsel %vm140, %v1539, 0.0
    %1541 = vadd.xlane.f32.xlu0 %v1540
    %v1542 = vpop.xlane.xlu0 %1541
    %v1543 = vrcp.pop %v1542
    %v1544 = vmul.f32 %v1539, %v1543
    %v1545 = vpack.c.bf16 %v1544, %v1544
    %v1546 = vlaneseq
    %v1547 = vshrl.u32 %v1546, 7
    %v1548 = vsub.s32 2, %v1547
    %v1549 = vrot.slane %v73, %v1548
    %v1554 = vunpack.c.l.b16 %v60
    %v1555 = vunpack.c.l.b16 %v61
    %v1556 = vunpack.c.l.b16 %v62
    %v1557 = vunpack.c.l.b16 %v63
    %v1558 = vpack.c.b16 %v1555, %v1554
    %v1559 = vpack.c.b16 %v1557, %v1556
    %1562 = vmatprep.subr.bf16.mxu0 0
    %1563 = vmatpush1.bf16.msra.mxu0 %v1558
    %1564 = vmatprep.subr.bf16.mxu0 0
    %1565 = vmatpush1.bf16.msra.mxu0 %v1559
    %1566 = vmatprep.subr.bf16.mxu0 0
    %1567 = vmatpush1.bf16.msra.mxu0 0
    %1568 = vmatprep.subr.bf16.mxu0 0
    %1569 = vmatpush1.bf16.msra.mxu0 0
    %1570 = vmatprep.subr.bf16.mxu0 0
    %1571 = vmatpush1.bf16.msra.mxu0 0
    %1572 = vmatprep.subr.bf16.mxu0 0
    %1573 = vmatpush1.bf16.msra.mxu0 0
    %1574 = vmatprep.subr.bf16.mxu0 0
    %1575 = vmatpush1.bf16.msra.mxu0 0
    %1576 = vmatprep.subr.bf16.mxu0 0
    %1577 = vmatpush1.bf16.msra.mxu0 0
    %1578 = vmatprep.subr.bf16.mxu0 0
    %1579 = vmatpush1.bf16.msra.mxu0 0
    %1580 = vmatprep.subr.bf16.mxu0 0
    %1581 = vmatpush1.bf16.msra.mxu0 0
    %1582 = vmatprep.subr.bf16.mxu0 0
    %1583 = vmatpush1.bf16.msra.mxu0 0
    %1584 = vmatprep.subr.bf16.mxu0 0
    %1585 = vmatpush1.bf16.msra.mxu0 0
    %1586 = vmatprep.subr.bf16.mxu0 0
    %1587 = vmatpush1.bf16.msra.mxu0 0
    %1588 = vmatprep.subr.bf16.mxu0 0
    %1589 = vmatpush1.bf16.msra.mxu0 0
    %1590 = vmatprep.subr.bf16.mxu0 0
    %1591 = vmatpush1.bf16.msra.mxu0 0
    %1592 = vmatprep.subr.bf16.mxu0 0
    %1593 = vmatpush1.bf16.msra.mxu0 0
    %1594 = vmatprep.mubr.bf16.mxu0 0
    %1595 = vmatmul.mubr.bf16.gmra.mrb[0].mxu0 %v1490
    %v1596 = vpop.f32.mrb[0].mxu0
    %v1597 = vadd.f32 %v1549, %v1596
    %v1598 = vpop.f32.mrb[0].mxu0
    %v1599 = vpop.f32.mrb[0].mxu0
    %v1600 = vpop.f32.mrb[0].mxu0
    %1601 = vdwg.mxu0
    %v1602 = vpack.c.bf16 %v1597, %v1597
    %v1604 = vsel %vm140, %v1545, 0
    %v1607 = vsel %vm206, %v1602, 0
    %1609 = vmatprep.subr.bf16.mxu0 0
    %1610 = vmatpush1.bf16.msra.mxu0 %v1607
    %1611 = vmatprep.subr.bf16.mxu0 0
    %1612 = vmatpush1.bf16.msra.mxu0 0
    %1613 = vmatprep.subr.bf16.mxu0 0
    %1614 = vmatpush1.bf16.msra.mxu0 0
    %1615 = vmatprep.subr.bf16.mxu0 0
    %1616 = vmatpush1.bf16.msra.mxu0 0
    %1617 = vmatprep.subr.bf16.mxu0 0
    %1618 = vmatpush1.bf16.msra.mxu0 0
    %1619 = vmatprep.subr.bf16.mxu0 0
    %1620 = vmatpush1.bf16.msra.mxu0 0
    %1621 = vmatprep.subr.bf16.mxu0 0
    %1622 = vmatpush1.bf16.msra.mxu0 0
    %1623 = vmatprep.subr.bf16.mxu0 0
    %1624 = vmatpush1.bf16.msra.mxu0 0
    %1625 = vmatprep.subr.bf16.mxu0 0
    %1626 = vmatpush1.bf16.msra.mxu0 0
    %1627 = vmatprep.subr.bf16.mxu0 0
    %1628 = vmatpush1.bf16.msra.mxu0 0
    %1629 = vmatprep.subr.bf16.mxu0 0
    %1630 = vmatpush1.bf16.msra.mxu0 0
    %1631 = vmatprep.subr.bf16.mxu0 0
    %1632 = vmatpush1.bf16.msra.mxu0 0
    %1633 = vmatprep.subr.bf16.mxu0 0
    %1634 = vmatpush1.bf16.msra.mxu0 0
    %1635 = vmatprep.subr.bf16.mxu0 0
    %1636 = vmatpush1.bf16.msra.mxu0 0
    %1637 = vmatprep.subr.bf16.mxu0 0
    %1638 = vmatpush1.bf16.msra.mxu0 0
    %1639 = vmatprep.subr.bf16.mxu0 0
    %1640 = vmatpush1.bf16.msra.mxu0 0
    %1641 = vmatprep.mubr.bf16.mxu0 0
    %1642 = vmatmul.mubr.bf16.gmra.mrb[0].mxu0 %v1604
    %v1643 = vpop.f32.mrb[0].mxu0
    %v1644 = vadd.f32 0.0, %v1643
    %v1645 = vpop.f32.mrb[0].mxu0
    %v1646 = vpop.f32.mrb[0].mxu0
    %v1647 = vpop.f32.mrb[0].mxu0
    %1648 = vdwg.mxu0
    %v1649 = vmax.f32 %v1644, 0.0
    %v1650 = vpack.c.bf16 %v1649, %v1649
    %v1651 = vlaneseq
    %v1652 = vshrl.u32 %v1651, 7
    %v1653 = vsub.s32 3, %v1652
    %v1654 = vrot.slane %v73, %v1653
    %v1663 = vunpack.c.l.b16 %v64
    %v1664 = vunpack.c.l.b16 %v65
    %v1665 = vunpack.c.l.b16 %v66
    %v1666 = vunpack.c.l.b16 %v67
    %v1667 = vunpack.c.l.b16 %v68
    %v1668 = vunpack.c.l.b16 %v69
    %v1669 = vunpack.c.l.b16 %v70
    %v1670 = vunpack.c.l.b16 %v71
    %v1671 = vpack.c.b16 %v1664, %v1663
    %v1672 = vpack.c.b16 %v1666, %v1665
    %v1673 = vpack.c.b16 %v1668, %v1667
    %v1674 = vpack.c.b16 %v1670, %v1669
    %v1680 = vsel %vm1265, %v1650, 0
    %1682 = vmatprep.subr.bf16.mxu0 0
    %1683 = vmatpush1.bf16.msra.mxu0 %v1671
    %1684 = vmatprep.subr.bf16.mxu0 0
    %1685 = vmatpush1.bf16.msra.mxu0 %v1672
    %1686 = vmatprep.subr.bf16.mxu0 0
    %1687 = vmatpush1.bf16.msra.mxu0 %v1673
    %1688 = vmatprep.subr.bf16.mxu0 0
    %1689 = vmatpush1.bf16.msra.mxu0 %v1674
    %1690 = vmatprep.subr.bf16.mxu0 0
    %1691 = vmatpush1.bf16.msra.mxu0 0
    %1692 = vmatprep.subr.bf16.mxu0 0
    %1693 = vmatpush1.bf16.msra.mxu0 0
    %1694 = vmatprep.subr.bf16.mxu0 0
    %1695 = vmatpush1.bf16.msra.mxu0 0
    %1696 = vmatprep.subr.bf16.mxu0 0
    %1697 = vmatpush1.bf16.msra.mxu0 0
    %1698 = vmatprep.subr.bf16.mxu0 0
    %1699 = vmatpush1.bf16.msra.mxu0 0
    %1700 = vmatprep.subr.bf16.mxu0 0
    %1701 = vmatpush1.bf16.msra.mxu0 0
    %1702 = vmatprep.subr.bf16.mxu0 0
    %1703 = vmatpush1.bf16.msra.mxu0 0
    %1704 = vmatprep.subr.bf16.mxu0 0
    %1705 = vmatpush1.bf16.msra.mxu0 0
    %1706 = vmatprep.subr.bf16.mxu0 0
    %1707 = vmatpush1.bf16.msra.mxu0 0
    %1708 = vmatprep.subr.bf16.mxu0 0
    %1709 = vmatpush1.bf16.msra.mxu0 0
    %1710 = vmatprep.subr.bf16.mxu0 0
    %1711 = vmatpush1.bf16.msra.mxu0 0
    %1712 = vmatprep.subr.bf16.mxu0 0
    %1713 = vmatpush1.bf16.msra.mxu0 0
    %1714 = vmatprep.mubr.bf16.mxu0 0
    %1715 = vmatmul.mubr.bf16.gmra.mrb[0].mxu0 %v1680
    %v1716 = vpop.f32.mrb[0].mxu0
    %v1717 = vadd.f32 %v1654, %v1716
    %v1718 = vpop.f32.mrb[0].mxu0
    %v1719 = vpop.f32.mrb[0].mxu0
    %v1720 = vpop.f32.mrb[0].mxu0
    %1721 = vdwg.mxu0
    %v1722 = vpack.c.bf16 %v1717, %v1717
    %v1724 = vsel %vm206, %v1722, 0
    %1726 = vmatprep.subr.bf16.mxu0 0
    %1727 = vmatpush1.bf16.msra.mxu0 %v1724
    %1728 = vmatprep.subr.bf16.mxu0 0
    %1729 = vmatpush1.bf16.msra.mxu0 0
    %1730 = vmatprep.subr.bf16.mxu0 0
    %1731 = vmatpush1.bf16.msra.mxu0 0
    %1732 = vmatprep.subr.bf16.mxu0 0
    %1733 = vmatpush1.bf16.msra.mxu0 0
    %1734 = vmatprep.subr.bf16.mxu0 0
    %1735 = vmatpush1.bf16.msra.mxu0 0
    %1736 = vmatprep.subr.bf16.mxu0 0
    %1737 = vmatpush1.bf16.msra.mxu0 0
    %1738 = vmatprep.subr.bf16.mxu0 0
    %1739 = vmatpush1.bf16.msra.mxu0 0
    %1740 = vmatprep.subr.bf16.mxu0 0
    %1741 = vmatpush1.bf16.msra.mxu0 0
    %1742 = vmatprep.subr.bf16.mxu0 0
    %1743 = vmatpush1.bf16.msra.mxu0 0
    %1744 = vmatprep.subr.bf16.mxu0 0
    %1745 = vmatpush1.bf16.msra.mxu0 0
    %1746 = vmatprep.subr.bf16.mxu0 0
    %1747 = vmatpush1.bf16.msra.mxu0 0
    %1748 = vmatprep.subr.bf16.mxu0 0
    %1749 = vmatpush1.bf16.msra.mxu0 0
    %1750 = vmatprep.subr.bf16.mxu0 0
    %1751 = vmatpush1.bf16.msra.mxu0 0
    %1752 = vmatprep.subr.bf16.mxu0 0
    %1753 = vmatpush1.bf16.msra.mxu0 0
    %1754 = vmatprep.subr.bf16.mxu0 0
    %1755 = vmatpush1.bf16.msra.mxu0 0
    %1756 = vmatprep.subr.bf16.mxu0 0
    %1757 = vmatpush1.bf16.msra.mxu0 0
    %1758 = vmatprep.mubr.bf16.mxu0 0
    %1759 = vmatmul.mubr.bf16.gmra.mrb[0].mxu0 %v1604
    %v1760 = vpop.f32.mrb[0].mxu0
    %v1761 = vadd.f32 0.0, %v1760
    %v1762 = vpop.f32.mrb[0].mxu0
    %v1763 = vpop.f32.mrb[0].mxu0
    %v1764 = vpop.f32.mrb[0].mxu0
    %1765 = vdwg.mxu0
    %v1766 = vmul.f32 %v1761, %v24
    %v1767 = vadd.f32 %v1350, %v1766
    %1768 = vst.msk [vmem:[#allocation3] sm:$0xff] %vm91, %v1767
    %v1769 = vpack.c.bf16 %v1485, %v1485
    %v1771 = vsel %vm91, %v1769, 0
    %1773 = vmatprep.subr.bf16.mxu0 0
    %1774 = vmatpush1.bf16.xpose.msra.mxu0 %v1771
    %1775 = vmatprep.subr.bf16.mxu0 0
    %1776 = vmatpush1.bf16.xpose.msra.mxu0 0
    %1777 = vmatprep.subr.bf16.mxu0 0
    %1778 = vmatpush1.bf16.xpose.msra.mxu0 0
    %1779 = vmatprep.subr.bf16.mxu0 0
    %1780 = vmatpush1.bf16.xpose.msra.mxu0 0
    %1781 = vmatprep.subr.bf16.mxu0 0
    %1782 = vmatpush1.bf16.xpose.msra.mxu0 0
    %1783 = vmatprep.subr.bf16.mxu0 0
    %1784 = vmatpush1.bf16.xpose.msra.mxu0 0
    %1785 = vmatprep.subr.bf16.mxu0 0
    %1786 = vmatpush1.bf16.xpose.msra.mxu0 0
    %1787 = vmatprep.subr.bf16.mxu0 0
    %1788 = vmatpush1.bf16.xpose.msra.mxu0 0
    %1789 = vmatprep.subr.bf16.mxu0 0
    %1790 = vmatpush1.bf16.xpose.msra.mxu0 0
    %1791 = vmatprep.subr.bf16.mxu0 0
    %1792 = vmatpush1.bf16.xpose.msra.mxu0 0
    %1793 = vmatprep.subr.bf16.mxu0 0
    %1794 = vmatpush1.bf16.xpose.msra.mxu0 0
    %1795 = vmatprep.subr.bf16.mxu0 0
    %1796 = vmatpush1.bf16.xpose.msra.mxu0 0
    %1797 = vmatprep.subr.bf16.mxu0 0
    %1798 = vmatpush1.bf16.xpose.msra.mxu0 0
    %1799 = vmatprep.subr.bf16.mxu0 0
    %1800 = vmatpush1.bf16.xpose.msra.mxu0 0
    %1801 = vmatprep.subr.bf16.mxu0 0
    %1802 = vmatpush1.bf16.xpose.msra.mxu0 0
    %1803 = vmatprep.subr.bf16.mxu0 0
    %1804 = vmatpush1.bf16.xpose.msra.mxu0 0
    %1805 = vmatprep.mubr.bf16.mxu0 0
    %1806 = vmatmul.mubr.bf16.gmra.mrb[0].mxu0 %v1771
    %v1807 = vpop.f32.mrb[0].mxu0
    %v1808 = vadd.f32 0.0, %v1807
    %v1809 = vpop.f32.mrb[0].mxu0
    %v1810 = vpop.f32.mrb[0].mxu0
    %v1811 = vpop.f32.mrb[0].mxu0
    %1812 = vdwg.mxu0
    %v1813 = vmul.f32 %v1808, 0.17677669
    %v1814 = vadd.f32 %v1813, %v27
    %v1815 = vsel %vm140, %v1814, -inf
    %1816 = vmax.xlane.f32.xlu0 %v1815
    %v1817 = vpop.xlane.xlu0 %1816
    %v1818 = vsub.f32 %v1814, %v1817
    %v1819 = vmul.f32 %v1818, 1.442695
    %v1820 = vpow.pop %v1819
    %v1821 = vsel %vm140, %v1820, 0.0
    %1822 = vadd.xlane.f32.xlu0 %v1821
    %v1823 = vpop.xlane.xlu0 %1822
    %v1824 = vrcp.pop %v1823
    %v1825 = vmul.f32 %v1820, %v1824
    %v1826 = vpack.c.bf16 %v1825, %v1825
    %1827 = vmatprep.subr.bf16.mxu0 0
    %1828 = vmatpush1.bf16.msra.mxu0 %v1558
    %1829 = vmatprep.subr.bf16.mxu0 0
    %1830 = vmatpush1.bf16.msra.mxu0 %v1559
    %1831 = vmatprep.subr.bf16.mxu0 0
    %1832 = vmatpush1.bf16.msra.mxu0 0
    %1833 = vmatprep.subr.bf16.mxu0 0
    %1834 = vmatpush1.bf16.msra.mxu0 0
    %1835 = vmatprep.subr.bf16.mxu0 0
    %1836 = vmatpush1.bf16.msra.mxu0 0
    %1837 = vmatprep.subr.bf16.mxu0 0
    %1838 = vmatpush1.bf16.msra.mxu0 0
    %1839 = vmatprep.subr.bf16.mxu0 0
    %1840 = vmatpush1.bf16.msra.mxu0 0
    %1841 = vmatprep.subr.bf16.mxu0 0
    %1842 = vmatpush1.bf16.msra.mxu0 0
    %1843 = vmatprep.subr.bf16.mxu0 0
    %1844 = vmatpush1.bf16.msra.mxu0 0
    %1845 = vmatprep.subr.bf16.mxu0 0
    %1846 = vmatpush1.bf16.msra.mxu0 0
    %1847 = vmatprep.subr.bf16.mxu0 0
    %1848 = vmatpush1.bf16.msra.mxu0 0
    %1849 = vmatprep.subr.bf16.mxu0 0
    %1850 = vmatpush1.bf16.msra.mxu0 0
    %1851 = vmatprep.subr.bf16.mxu0 0
    %1852 = vmatpush1.bf16.msra.mxu0 0
    %1853 = vmatprep.subr.bf16.mxu0 0
    %1854 = vmatpush1.bf16.msra.mxu0 0
    %1855 = vmatprep.subr.bf16.mxu0 0
    %1856 = vmatpush1.bf16.msra.mxu0 0
    %1857 = vmatprep.subr.bf16.mxu0 0
    %1858 = vmatpush1.bf16.msra.mxu0 0
    %1859 = vmatprep.mubr.bf16.mxu0 0
    %1860 = vmatmul.mubr.bf16.gmra.mrb[0].mxu0 %v1771
    %v1861 = vpop.f32.mrb[0].mxu0
    %v1862 = vadd.f32 %v1549, %v1861
    %v1863 = vpop.f32.mrb[0].mxu0
    %v1864 = vpop.f32.mrb[0].mxu0
    %v1865 = vpop.f32.mrb[0].mxu0
    %1866 = vdwg.mxu0
    %v1867 = vpack.c.bf16 %v1862, %v1862
    %v1869 = vsel %vm140, %v1826, 0
    %v1872 = vsel %vm206, %v1867, 0
    %1874 = vmatprep.subr.bf16.mxu0 0
    %1875 = vmatpush1.bf16.msra.mxu0 %v1872
    %1876 = vmatprep.subr.bf16.mxu0 0
    %1877 = vmatpush1.bf16.msra.mxu0 0
    %1878 = vmatprep.subr.bf16.mxu0 0
    %1879 = vmatpush1.bf16.msra.mxu0 0
    %1880 = vmatprep.subr.bf16.mxu0 0
    %1881 = vmatpush1.bf16.msra.mxu0 0
    %1882 = vmatprep.subr.bf16.mxu0 0
    %1883 = vmatpush1.bf16.msra.mxu0 0
    %1884 = vmatprep.subr.bf16.mxu0 0
    %1885 = vmatpush1.bf16.msra.mxu0 0
    %1886 = vmatprep.subr.bf16.mxu0 0
    %1887 = vmatpush1.bf16.msra.mxu0 0
    %1888 = vmatprep.subr.bf16.mxu0 0
    %1889 = vmatpush1.bf16.msra.mxu0 0
    %1890 = vmatprep.subr.bf16.mxu0 0
    %1891 = vmatpush1.bf16.msra.mxu0 0
    %1892 = vmatprep.subr.bf16.mxu0 0
    %1893 = vmatpush1.bf16.msra.mxu0 0
    %1894 = vmatprep.subr.bf16.mxu0 0
    %1895 = vmatpush1.bf16.msra.mxu0 0
    %1896 = vmatprep.subr.bf16.mxu0 0
    %1897 = vmatpush1.bf16.msra.mxu0 0
    %1898 = vmatprep.subr.bf16.mxu0 0
    %1899 = vmatpush1.bf16.msra.mxu0 0
    %1900 = vmatprep.subr.bf16.mxu0 0
    %1901 = vmatpush1.bf16.msra.mxu0 0
    %1902 = vmatprep.subr.bf16.mxu0 0
    %1903 = vmatpush1.bf16.msra.mxu0 0
    %1904 = vmatprep.subr.bf16.mxu0 0
    %1905 = vmatpush1.bf16.msra.mxu0 0
    %1906 = vmatprep.mubr.bf16.mxu0 0
    %1907 = vmatmul.mubr.bf16.gmra.mrb[0].mxu0 %v1869
    %v1908 = vpop.f32.mrb[0].mxu0
    %v1909 = vadd.f32 0.0, %v1908
    %v1910 = vpop.f32.mrb[0].mxu0
    %v1911 = vpop.f32.mrb[0].mxu0
    %v1912 = vpop.f32.mrb[0].mxu0
    %1913 = vdwg.mxu0
    %v1914 = vmax.f32 %v1909, 0.0
    %v1915 = vpack.c.bf16 %v1914, %v1914
    %v1917 = vsel %vm1265, %v1915, 0
    %1919 = vmatprep.subr.bf16.mxu0 0
    %1920 = vmatpush1.bf16.msra.mxu0 %v1671
    %1921 = vmatprep.subr.bf16.mxu0 0
    %1922 = vmatpush1.bf16.msra.mxu0 %v1672
    %1923 = vmatprep.subr.bf16.mxu0 0
    %1924 = vmatpush1.bf16.msra.mxu0 %v1673
    %1925 = vmatprep.subr.bf16.mxu0 0
    %1926 = vmatpush1.bf16.msra.mxu0 %v1674
    %1927 = vmatprep.subr.bf16.mxu0 0
    %1928 = vmatpush1.bf16.msra.mxu0 0
    %1929 = vmatprep.subr.bf16.mxu0 0
    %1930 = vmatpush1.bf16.msra.mxu0 0
    %1931 = vmatprep.subr.bf16.mxu0 0
    %1932 = vmatpush1.bf16.msra.mxu0 0
    %1933 = vmatprep.subr.bf16.mxu0 0
    %1934 = vmatpush1.bf16.msra.mxu0 0
    %1935 = vmatprep.subr.bf16.mxu0 0
    %1936 = vmatpush1.bf16.msra.mxu0 0
    %1937 = vmatprep.subr.bf16.mxu0 0
    %1938 = vmatpush1.bf16.msra.mxu0 0
    %1939 = vmatprep.subr.bf16.mxu0 0
    %1940 = vmatpush1.bf16.msra.mxu0 0
    %1941 = vmatprep.subr.bf16.mxu0 0
    %1942 = vmatpush1.bf16.msra.mxu0 0
    %1943 = vmatprep.subr.bf16.mxu0 0
    %1944 = vmatpush1.bf16.msra.mxu0 0
    %1945 = vmatprep.subr.bf16.mxu0 0
    %1946 = vmatpush1.bf16.msra.mxu0 0
    %1947 = vmatprep.subr.bf16.mxu0 0
    %1948 = vmatpush1.bf16.msra.mxu0 0
    %1949 = vmatprep.subr.bf16.mxu0 0
    %1950 = vmatpush1.bf16.msra.mxu0 0
    %1951 = vmatprep.mubr.bf16.mxu0 0
    %1952 = vmatmul.mubr.bf16.gmra.mrb[0].mxu0 %v1917
    %v1953 = vpop.f32.mrb[0].mxu0
    %v1954 = vadd.f32 %v1654, %v1953
    %v1955 = vpop.f32.mrb[0].mxu0
    %v1956 = vpop.f32.mrb[0].mxu0
    %v1957 = vpop.f32.mrb[0].mxu0
    %1958 = vdwg.mxu0
    %v1959 = vpack.c.bf16 %v1954, %v1954
    %v1961 = vsel %vm206, %v1959, 0
    %1963 = vmatprep.subr.bf16.mxu0 0
    %1964 = vmatpush1.bf16.msra.mxu0 %v1961
    %1965 = vmatprep.subr.bf16.mxu0 0
    %1966 = vmatpush1.bf16.msra.mxu0 0
    %1967 = vmatprep.subr.bf16.mxu0 0
    %1968 = vmatpush1.bf16.msra.mxu0 0
    %1969 = vmatprep.subr.bf16.mxu0 0
    %1970 = vmatpush1.bf16.msra.mxu0 0
    %1971 = vmatprep.subr.bf16.mxu0 0
    %1972 = vmatpush1.bf16.msra.mxu0 0
    %1973 = vmatprep.subr.bf16.mxu0 0
    %1974 = vmatpush1.bf16.msra.mxu0 0
    %1975 = vmatprep.subr.bf16.mxu0 0
    %1976 = vmatpush1.bf16.msra.mxu0 0
    %1977 = vmatprep.subr.bf16.mxu0 0
    %1978 = vmatpush1.bf16.msra.mxu0 0
    %1979 = vmatprep.subr.bf16.mxu0 0
    %1980 = vmatpush1.bf16.msra.mxu0 0
    %1981 = vmatprep.subr.bf16.mxu0 0
    %1982 = vmatpush1.bf16.msra.mxu0 0
    %1983 = vmatprep.subr.bf16.mxu0 0
    %1984 = vmatpush1.bf16.msra.mxu0 0
    %1985 = vmatprep.subr.bf16.mxu0 0
    %1986 = vmatpush1.bf16.msra.mxu0 0
    %1987 = vmatprep.subr.bf16.mxu0 0
    %1988 = vmatpush1.bf16.msra.mxu0 0
    %1989 = vmatprep.subr.bf16.mxu0 0
    %1990 = vmatpush1.bf16.msra.mxu0 0
    %1991 = vmatprep.subr.bf16.mxu0 0
    %1992 = vmatpush1.bf16.msra.mxu0 0
    %1993 = vmatprep.subr.bf16.mxu0 0
    %1994 = vmatpush1.bf16.msra.mxu0 0
    %1995 = vmatprep.mubr.bf16.mxu0 0
    %1996 = vmatmul.mubr.bf16.gmra.mrb[0].mxu0 %v1869
    %v1997 = vpop.f32.mrb[0].mxu0
    %v1998 = vadd.f32 0.0, %v1997
    %v1999 = vpop.f32.mrb[0].mxu0
    %v2000 = vpop.f32.mrb[0].mxu0
    %v2001 = vpop.f32.mrb[0].mxu0
    %2002 = vdwg.mxu0
    %v2003 = vmul.f32 %v1998, %v25
    %v2004 = vadd.f32 %v1351, %v2003
    %2005 = vst.msk [vmem:[#allocation3 + $0x8] sm:$0xff] %vm91, %v2004
    // Predicated region
    $region22: #{custom_transformer_encoder.1} parent=1 // pred_check
      _
    $region23: #{custom_transformer_encoder.1} parent=1 // pred_check_branch
      %2007 = sbr.rel (0) target = $region25
    $region24: #{custom_transformer_encoder.1} parent=1 // pred_region
      %s2009 = ssub.s32 256, 256
      %2010 = vsyncadd [#allocation4], %s2009
      %s2011 = sshll.u32 [#allocation3], 4
      %s2012 = int_to_ptr.vmem [resolvable:$true] %s2011
      %2017 = dma.vmem_to_hbm [thread:$0]  %s2012, 256, %s5, [#allocation4], 128, 128, 8
    $region25: #{custom_transformer_encoder.1} parent=1 // pred_fallthru
      _
    // Predicated region
    $region26: #{custom_transformer_encoder.1} parent=1 // pred_check
      _
    $region27: #{custom_transformer_encoder.1} parent=1 // pred_check_branch
      %2019 = sbr.rel (0) target = $region29
    $region28: #{custom_transformer_encoder.1} parent=1 // pred_region
      %2020 = dma.done [#allocation4], 256
    $region29: #{custom_transformer_encoder.1} parent=1 // pred_fallthru
      _
    %2021 = vsyncpa [#allocation4], 1

</llo_original>
